<compile_context>
chip_gen: v7x
topology: tpu7x:2x2x1
jax: 0.10.0
libtpu: 0.0.40
codegen_flags: <defaults>
</compile_context>

<pallas_src>
import jax
import jax.numpy as jnp
from jax.experimental import pallas as pl
from jax.experimental.pallas import tpu as pltpu

EPS = 1e-5


def _fused_kernel(x211_ref,   # (1, C_IN)        relu input (from [1,110,1,1])
                  w1t_ref,    # (C_IN, C_MID)    conv2d68 weight, transposed, bf16
                  b1_ref,     # (1, C_MID)       conv2d68 bias
                  x209_ref,   # (HW, C_MID)      second input, channel-on-lanes
                  w2t_ref,    # (C_MID, BLK)     conv2d69 weight^T block, bf16
                  gamma_ref,  # (1, BLK)         batchnorm weight block
                  beta_ref,   # (1, BLK)         batchnorm bias block
                  out_ref):   # (HW, BLK)
    # x212 = relu(x211)
    x212 = jnp.maximum(x211_ref[...], 0.0)                               # (1, C_IN)

    # x213 = conv2d68(x212): 1x1 conv on a 1x1 map == (1,C_IN) @ (C_IN,C_MID)
    # bf16 inputs, f32 accumulate (MXU); result already in lane layout.
    x213 = jnp.dot(x212.astype(w1t_ref.dtype), w1t_ref[...],
                   preferred_element_type=jnp.float32) + b1_ref[...]     # (1, C_MID)

    # x214 = sigmoid(x213)  (EUP)
    gate = jax.nn.sigmoid(x213)                                          # (1, C_MID)

    # x215 = x214 * x209 : per-channel gate, broadcast over the HW sublane axis
    x215 = x209_ref[...] * gate                                          # (HW, C_MID)

    # x216 = conv2d69(x215): 1x1 conv == X @ W2^T, bf16 in, f32 accumulate (MXU)
    x216 = jnp.dot(x215.astype(w2t_ref.dtype), w2t_ref[...],
                   preferred_element_type=jnp.float32)                   # (HW, BLK)

    # x217 = batchnorm2d (training mode -> batch stats over N*H*W, biased var),
    # folded into one per-channel scale + shift.  Reduce over the sublane axis.
    hw = x216.shape[0]
    inv_hw = 1.0 / hw
    mean = jnp.sum(x216, axis=0, keepdims=True) * inv_hw                 # (1, BLK)
    mean_sq = jnp.sum(x216 * x216, axis=0, keepdims=True) * inv_hw       # (1, BLK)
    var = jnp.maximum(mean_sq - mean * mean, 0.0)                        # clamp: no NaN
    scale = jax.lax.rsqrt(var + EPS) * gamma_ref[...]                    # (1, BLK)
    shift = beta_ref[...] - mean * scale                                 # (1, BLK)
    out_ref[...] = x216 * scale + shift


def module_m_forward(x211, x209, params):
    """x211: [1,110,1,1], x209: [1,440,7,7] (NCHW). Returns [1,440,7,7]."""
    n, c_in = x211.shape[0], x211.shape[1]
    nb, c_out, h, w = x209.shape
    assert n == 1 and nb == 1, "kernel specialized to batch size 1 (as in the module spec)"
    hw = h * w

    c_out_pad = params["w2t"].shape[1]
    n_blocks = 2
    blk = c_out_pad // n_blocks

    x211_row = x211.reshape(1, c_in)                     # (1, 110)
    # Channel-on-lanes layout (lane-dense): tiny wrapper-side transpose.
    x209_hwc = x209.reshape(c_out, hw).T                 # (49, 440)

    flops = 2 * hw * c_out * c_out_pad + n_blocks * 2 * c_in * c_out + 8 * hw * c_out_pad
    bytes_accessed = (params["w2t"].size * 2             # bf16 weight (dominant DMA)
                      + params["w1t"].size * 2
                      + x209_hwc.size * 4
                      + hw * c_out_pad * 4               # output
                      + (c_in + c_out + 2 * c_out_pad) * 4)
    cost = pl.CostEstimate(flops=flops,
                           transcendentals=n_blocks * c_out + c_out_pad,
                           bytes_accessed=bytes_accessed)

    out_pad = pl.pallas_call(
        _fused_kernel,
        out_shape=jax.ShapeDtypeStruct((hw, c_out_pad), jnp.float32),
        grid=(n_blocks,),
        in_specs=[
            pl.BlockSpec((1, c_in), lambda j: (0, 0)),       # x211   (replicated)
            pl.BlockSpec((c_in, c_out), lambda j: (0, 0)),   # w1t    (replicated)
            pl.BlockSpec((1, c_out), lambda j: (0, 0)),      # b1     (replicated)
            pl.BlockSpec((hw, c_out), lambda j: (0, 0)),     # x209   (replicated)
            pl.BlockSpec((c_out, blk), lambda j: (0, j)),    # w2t    (split on c_out)
            pl.BlockSpec((1, blk), lambda j: (0, j)),        # gamma
            pl.BlockSpec((1, blk), lambda j: (0, j)),        # beta
        ],
        out_specs=pl.BlockSpec((hw, blk), lambda j: (0, j)),
        compiler_params=pltpu.CompilerParams(
            dimension_semantics=("parallel",)),
        cost_estimate=cost,
    )(x211_row, params["w1t"], params["b1"], x209_hwc,
      params["w2t"], params["gamma"], params["beta"])

    # Drop the zero-padded channels; (HW, C) -> NCHW.
    out_hwc = out_pad[:, :c_out]                          # (49, 440)
    return out_hwc.T.reshape(1, c_out, h, w)


def make_torch_style_params(key, c_in=110, c_out=440):
    """Deterministic synthetic parameters in PyTorch-native layouts/dtypes."""
    k1, k2, k3 = jax.random.split(key, 3)
    w1 = jax.random.normal(k1, (c_out, c_in, 1, 1), jnp.float32) * 0.05   # conv2d68.weight
    b1 = jax.random.normal(k2, (c_out,), jnp.float32) * 0.05              # conv2d68.bias
    w2 = jax.random.normal(k3, (c_out, c_out, 1, 1), jnp.float32) * 0.05  # conv2d69.weight
    gamma = jnp.ones((c_out,), jnp.float32)                               # batchnorm2d43.weight
    beta = jnp.zeros((c_out,), jnp.float32)                               # batchnorm2d43.bias
    return {"w1": w1, "b1": b1, "w2": w2, "gamma": gamma, "beta": beta}


def prepare_params(torch_params, c_out_pad=512):
    """One-time parameter setup: transpose, cast to bf16, pad c_out -> 512.

    Doing this here (not in the per-call forward path) removes the per-call
    f32->bf16 re-cast fusion that previously dominated HBM traffic.
    """
    w1 = torch_params["w1"]
    c_out, c_in = w1.shape[0], w1.shape[1]
    pad = c_out_pad - c_out

    w1t = jnp.transpose(w1.reshape(c_out, c_in)).astype(jnp.bfloat16)     # (c_in, c_out)
    w2t = jnp.transpose(torch_params["w2"].reshape(c_out, c_out))         # (c_in2, c_out)
    w2t = jnp.pad(w2t, ((0, 0), (0, pad))).astype(jnp.bfloat16)           # (440, 512)
    b1 = torch_params["b1"].reshape(1, c_out).astype(jnp.float32)         # (1, 440)
    gamma = jnp.pad(torch_params["gamma"], (0, pad),
                    constant_values=1.0).reshape(1, c_out_pad)            # (1, 512)
    beta = jnp.pad(torch_params["beta"], (0, pad)).reshape(1, c_out_pad)  # (1, 512)
    return {"w1t": w1t, "b1": b1, "w2t": w2t, "gamma": gamma, "beta": beta}


def reference_forward(x211, x209, torch_params):
    """Pure-JAX f32 reference of the PyTorch forward (training-mode BN stats)."""
    c_out, c_in = torch_params["w1"].shape[:2]
    _, _, h, w = x209.shape
    hw = h * w
    x212 = jnp.maximum(x211, 0.0).reshape(1, c_in)
    w1 = torch_params["w1"].reshape(c_out, c_in)
    x213 = x212 @ w1.T + torch_params["b1"][None, :]                      # (1, c_out)
    x214 = jax.nn.sigmoid(x213)
    x215 = x209.reshape(c_out, hw) * x214.reshape(c_out, 1)               # (c_out, hw)
    w2 = torch_params["w2"].reshape(c_out, c_out)
    x216 = w2 @ x215                                                      # (c_out, hw)
    mean = jnp.mean(x216, axis=1, keepdims=True)
    var = jnp.var(x216, axis=1, keepdims=True)                            # biased, like PyTorch
    xhat = (x216 - mean) / jnp.sqrt(var + EPS)
    y = xhat * torch_params["gamma"][:, None] + torch_params["beta"][:, None]
    return y.reshape(1, c_out, h, w)


if __name__ == "__main__":
    key = jax.random.PRNGKey(0)
    kx1, kx2, kp = jax.random.split(key, 3)

    # Shapes implied by the module's forward.
    x211 = jax.random.normal(kx1, (1, 110, 1, 1), jnp.float32)
    x209 = jax.random.normal(kx2, (1, 440, 7, 7), jnp.float32)

    torch_params = make_torch_style_params(kp)
    params = prepare_params(torch_params)        # one-time setup (bf16 / transpose / pad)

    out = jax.jit(module_m_forward)(x211, x209, params)
    jax.block_until_ready(out)

    assert out.shape == (1, 440, 7, 7), out.shape
    assert bool(jnp.all(jnp.isfinite(out)))

    ref = reference_forward(x211, x209, torch_params)
    assert bool(jnp.allclose(out, ref, atol=7.5e-2, rtol=7.5e-2)), (
        float(jnp.max(jnp.abs(out - ref))))

    print("KERNEL_OK")
</pallas_src>

<mosaic_0001>
module attributes {stable_mosaic.version = 11 : i64} {
  func.func @_fused_kernel(%arg0: i32, %arg1: memref<1x110xf32, #tpu.memory_space<vmem>>, %arg2: memref<110x440xbf16, #tpu.memory_space<vmem>>, %arg3: memref<1x440xf32, #tpu.memory_space<vmem>>, %arg4: memref<49x440xf32, #tpu.memory_space<vmem>>, %arg5: memref<440x256xbf16, #tpu.memory_space<vmem>>, %arg6: memref<1x256xf32, #tpu.memory_space<vmem>>, %arg7: memref<1x256xf32, #tpu.memory_space<vmem>>, %arg8: memref<49x256xf32, #tpu.memory_space<vmem>>) attributes {dimension_semantics = [#tpu.dimension_semantics<parallel>], iteration_bounds = array<i64: 2>, scalar_prefetch = 0 : i64, scratch_operands = 0 : i64, tpu.core_type = #tpu.core_type<tc>, window_params = [{pipeline_mode = #tpu.pipeline_mode<synchronous>, transform_indices = @transform_0, window_bounds = array<i64: 1, 110>}, {pipeline_mode = #tpu.pipeline_mode<synchronous>, transform_indices = @transform_1, window_bounds = array<i64: 110, 440>}, {pipeline_mode = #tpu.pipeline_mode<synchronous>, transform_indices = @transform_2, window_bounds = array<i64: 1, 440>}, {pipeline_mode = #tpu.pipeline_mode<synchronous>, transform_indices = @transform_3, window_bounds = array<i64: 49, 440>}, {transform_indices = @transform_4, window_bounds = array<i64: 440, 256>}, {transform_indices = @transform_5, window_bounds = array<i64: 1, 256>}, {transform_indices = @transform_6, window_bounds = array<i64: 1, 256>}, {transform_indices = @transform_7, window_bounds = array<i64: 49, 256>}]} {
    %c0 = arith.constant 0 : index
    %c0_0 = arith.constant 0 : index
    %0 = vector.load %arg1[%c0, %c0_0] : memref<1x110xf32, #tpu.memory_space<vmem>>, vector<1x110xf32>
    %cst = arith.constant 0.000000e+00 : f32
    %1 = vector.broadcast %cst : f32 to vector<1x110xf32>
    %2 = arith.maximumf %0, %1 : vector<1x110xf32>
    %3 = arith.truncf %2 : vector<1x110xf32> to vector<1x110xbf16>
    %c0_1 = arith.constant 0 : index
    %c0_2 = arith.constant 0 : index
    %4 = vector.load %arg2[%c0_1, %c0_2] : memref<110x440xbf16, #tpu.memory_space<vmem>>, vector<110x440xbf16>
    %cst_3 = arith.constant dense<0.000000e+00> : vector<1x440xf32>
    %5 = tpu.matmul %3, %4, %cst_3 {dimension_numbers = #tpu.dot_dimension_numbers<[1], [0], [0], [1], [0, 0, 1, 1], [], []>} : vector<1x110xbf16>, vector<110x440xbf16>, vector<1x440xf32> -> vector<1x440xf32>
    %c0_4 = arith.constant 0 : index
    %c0_5 = arith.constant 0 : index
    %6 = vector.load %arg3[%c0_4, %c0_5] : memref<1x440xf32, #tpu.memory_space<vmem>>, vector<1x440xf32>
    %7 = arith.addf %5, %6 : vector<1x440xf32>
    %8 = arith.negf %7 : vector<1x440xf32>
    %9 = math.exp %8 : vector<1x440xf32>
    %cst_6 = arith.constant 1.000000e+00 : f32
    %10 = vector.broadcast %cst_6 : f32 to vector<1x440xf32>
    %11 = arith.addf %10, %9 : vector<1x440xf32>
    %12 = arith.divf %10, %11 : vector<1x440xf32>
    %c0_7 = arith.constant 0 : index
    %c0_8 = arith.constant 0 : index
    %13 = vector.load %arg4[%c0_7, %c0_8] : memref<49x440xf32, #tpu.memory_space<vmem>>, vector<49x440xf32>
    %14 = vector.broadcast %12 : vector<1x440xf32> to vector<49x440xf32>
    %15 = arith.mulf %13, %14 : vector<49x440xf32>
    %16 = arith.truncf %15 : vector<49x440xf32> to vector<49x440xbf16>
    %c0_9 = arith.constant 0 : index
    %c0_10 = arith.constant 0 : index
    %17 = vector.load %arg5[%c0_9, %c0_10] : memref<440x256xbf16, #tpu.memory_space<vmem>>, vector<440x256xbf16>
    %cst_11 = arith.constant dense<0.000000e+00> : vector<49x256xf32>
    %18 = tpu.matmul %16, %17, %cst_11 {dimension_numbers = #tpu.dot_dimension_numbers<[1], [0], [0], [1], [0, 0, 1, 1], [], []>} : vector<49x440xbf16>, vector<440x256xbf16>, vector<49x256xf32> -> vector<49x256xf32>
    %cst_12 = arith.constant dense<0.000000e+00> : vector<256xf32>
    %19 = vector.multi_reduction <add>, %18, %cst_12 [0] : vector<49x256xf32> to vector<256xf32>
    %20 = vector.shape_cast %19 : vector<256xf32> to vector<1x256xf32>
    %cst_13 = arith.constant 0.0204081628 : f32
    %21 = vector.broadcast %cst_13 : f32 to vector<1x256xf32>
    %22 = arith.mulf %20, %21 : vector<1x256xf32>
    %23 = arith.mulf %18, %18 : vector<49x256xf32>
    %cst_14 = arith.constant dense<0.000000e+00> : vector<256xf32>
    %24 = vector.multi_reduction <add>, %23, %cst_14 [0] : vector<49x256xf32> to vector<256xf32>
    %25 = vector.shape_cast %24 : vector<256xf32> to vector<1x256xf32>
    %cst_15 = arith.constant 0.0204081628 : f32
    %26 = vector.broadcast %cst_15 : f32 to vector<1x256xf32>
    %27 = arith.mulf %25, %26 : vector<1x256xf32>
    %28 = arith.mulf %22, %22 : vector<1x256xf32>
    %29 = arith.subf %27, %28 : vector<1x256xf32>
    %cst_16 = arith.constant 0.000000e+00 : f32
    %30 = vector.broadcast %cst_16 : f32 to vector<1x256xf32>
    %31 = arith.maximumf %29, %30 : vector<1x256xf32>
    %cst_17 = arith.constant 9.99999974E-6 : f32
    %32 = vector.broadcast %cst_17 : f32 to vector<1x256xf32>
    %33 = arith.addf %31, %32 : vector<1x256xf32>
    %34 = math.rsqrt %33 : vector<1x256xf32>
    %c0_18 = arith.constant 0 : index
    %c0_19 = arith.constant 0 : index
    %35 = vector.load %arg6[%c0_18, %c0_19] : memref<1x256xf32, #tpu.memory_space<vmem>>, vector<1x256xf32>
    %36 = arith.mulf %34, %35 : vector<1x256xf32>
    %c0_20 = arith.constant 0 : index
    %c0_21 = arith.constant 0 : index
    %37 = vector.load %arg7[%c0_20, %c0_21] : memref<1x256xf32, #tpu.memory_space<vmem>>, vector<1x256xf32>
    %38 = arith.mulf %22, %36 : vector<1x256xf32>
    %39 = arith.subf %37, %38 : vector<1x256xf32>
    %40 = vector.broadcast %36 : vector<1x256xf32> to vector<49x256xf32>
    %41 = arith.mulf %18, %40 : vector<49x256xf32>
    %42 = vector.broadcast %39 : vector<1x256xf32> to vector<49x256xf32>
    %43 = arith.addf %41, %42 : vector<49x256xf32>
    %c0_22 = arith.constant 0 : index
    %c0_23 = arith.constant 0 : index
    %44 = vector.load %arg8[%c0_22, %c0_23] : memref<49x256xf32, #tpu.memory_space<vmem>>, vector<49x256xf32>
    tpu.vector_store %arg8[%c0_22, %c0_23], %43 {strides = array<i32>} : memref<49x256xf32, #tpu.memory_space<vmem>>, vector<49x256xf32>,
    return
  }
  func.func @transform_0(%arg0: i32) -> (i32, i32) {
    %c0_i32 = arith.constant 0 : i32
    %c0_i32_0 = arith.constant 0 : i32
    %c0_i32_1 = arith.constant 0 : i32
    return %c0_i32, %c0_i32_0 : i32, i32
  }
  func.func @transform_1(%arg0: i32) -> (i32, i32) {
    %c0_i32 = arith.constant 0 : i32
    %c0_i32_0 = arith.constant 0 : i32
    %c0_i32_1 = arith.constant 0 : i32
    return %c0_i32, %c0_i32_0 : i32, i32
  }
  func.func @transform_2(%arg0: i32) -> (i32, i32) {
    %c0_i32 = arith.constant 0 : i32
    %c0_i32_0 = arith.constant 0 : i32
    %c0_i32_1 = arith.constant 0 : i32
    return %c0_i32, %c0_i32_0 : i32, i32
  }
  func.func @transform_3(%arg0: i32) -> (i32, i32) {
    %c0_i32 = arith.constant 0 : i32
    %c0_i32_0 = arith.constant 0 : i32
    %c0_i32_1 = arith.constant 0 : i32
    return %c0_i32, %c0_i32_0 : i32, i32
  }
  func.func @transform_4(%arg0: i32) -> (i32, i32) {
    %c0_i32 = arith.constant 0 : i32
    %c0_i32_0 = arith.constant 0 : i32
    return %c0_i32, %arg0 : i32, i32
  }
  func.func @transform_5(%arg0: i32) -> (i32, i32) {
    %c0_i32 = arith.constant 0 : i32
    %c0_i32_0 = arith.constant 0 : i32
    return %c0_i32, %arg0 : i32, i32
  }
  func.func @transform_6(%arg0: i32) -> (i32, i32) {
    %c0_i32 = arith.constant 0 : i32
    %c0_i32_0 = arith.constant 0 : i32
    return %c0_i32, %arg0 : i32, i32
  }
  func.func @transform_7(%arg0: i32) -> (i32, i32) {
    %c0_i32 = arith.constant 0 : i32
    %c0_i32_0 = arith.constant 0 : i32
    return %c0_i32, %arg0 : i32, i32
  }
}

</mosaic_0001>

<llo_original>
// kernel: module_m_forward.1
$region0: #{module_m_forward.1}
  #allocation0 [shape = 'u32[]', space=smem, size = 0x4, offset = 0x4, fixed_abs, tag = 'smem constant byte address 0x4 - core index']
  #allocation1 [shape = 'u32[144,128]{1,0:T(1,128)}', space=vmem, size = 0x12000, scoped, tag = 'internal scratch']
  %s0 = inlined_call_operand.vmem [shape: f32[1,110], index: 0, kind: input, shape index: {}]
  %s1 = inlined_call_operand.vmem [shape: bf16[110,440], index: 1, kind: input, shape index: {}]
  %s2 = inlined_call_operand.vmem [shape: f32[1,440], index: 2, kind: input, shape index: {}]
  %s3 = inlined_call_operand.vmem [shape: f32[49,440], index: 3, kind: input, shape index: {}]
  %s4 = inlined_call_operand.vmem [shape: bf16[440,512], index: 4, kind: input, shape index: {}]
  %s5 = inlined_call_operand.vmem [shape: f32[1,512], index: 5, kind: input, shape index: {}]
  %s6 = inlined_call_operand.vmem [shape: f32[1,512], index: 6, kind: input, shape index: {}]
  %s7 = inlined_call_operand.vmem [shape: f32[49,512], index: 7, kind: output, shape index: {}]
  %s8 = sld [smem:[#allocation0]]
  $region118: #{module_m_forward.1} parent=0
    _
  %s10 = ssub.s32 1, %s8
  %s11 = scalar_select 0, %s10, %s8
  $region1: #{module_m_forward.1} parent=0
    #allocation2 [shape = 'u8[450560]{0}', space=vmem, size = 0x6e000, scoped, tag = 'input window, operand 4']
    #allocation3 [shape = 'u8[114688]{0}', space=vmem, size = 0x1c000, scoped, tag = 'output window, operand 0']
    loop: start=0, step=1, limit=4
    $region2: #{module_m_forward.1} parent=1 // loop_pre_header
      _
    $region3: #{module_m_forward.1} parent=1 // loop_header
      %s13 = sphi 0, %s17
      %p14 = scmp.ge.s32.totalorder %s13, 4
      %s21 = sphi 0, %s21
      %s23 = sphi 0, %s21
      %s24 = sphi 0, %s23
      %s38 = sphi 0, %s24
      %s42 = sphi 0, %s42
      %s44 = sphi 0, %s42
      %s45 = sphi 0, %s44
      %s59 = sphi 0, %s45
      %s63 = sphi 0, %s63
      %s65 = sphi 0, %s63
      %s66 = sphi 0, %s65
      %s80 = sphi 0, %s66
      %s84 = sphi 0, %s84
      %s86 = sphi 0, %s84
      %s87 = sphi 0, %s86
      %s101 = sphi 0, %s87
      %s107 = sphi 0, %s109
      %s110 = sphi 0, %s107
      %s111 = sphi 0, %s110
      %s127 = sphi 0, %s111
      %s133 = sphi 0, %s135
      %s136 = sphi 0, %s133
      %s137 = sphi 0, %s136
      %s153 = sphi 0, %s137
      %s159 = sphi 0, %s161
      %s162 = sphi 0, %s159
      %s163 = sphi 0, %s162
      %s179 = sphi 0, %s163
      %s185 = sphi 0, %s187
      %s188 = sphi 0, %s185
      %s189 = sphi 0, %s188
      %s205 = sphi 0, %s189
    $region4: #{module_m_forward.1} parent=1 // loop_header_branch
      %16 = sbr.rel (%p14) target = $region8
    $region5: #{module_m_forward.1} parent=1 // loop_body
      %s18 = ssub.s32 %s13, 1
      %s19 = ssub.s32 %s13, 2
      %s20 = sadd.s32 %s13, 1
      %s22 = sadd.s32 %s21, 1
      %p25 = scmp.eq.s32.totalorder %s13, 1
      %p26 = scmp.ne.s32.totalorder %s21, %s23
      %p27 = scmp.eq.s32.totalorder %s13, 0
      %p28 = por %p26, %p27
      %p29 = scmp.ne.s32.totalorder %s21, %s23
      %p30 = scmp.eq.s32.totalorder %s18, 1
      %p31 = por %p29, %p30
      %p32 = scmp.ne.s32.totalorder %s23, %s24
      %p33 = scmp.eq.s32.totalorder %s18, 0
      %p34 = por %p32, %p33
      %p35 = scmp.ne.s32.totalorder %s23, %s24
      %p36 = scmp.eq.s32.totalorder %s19, 1
      %p37 = por %p35, %p36
      %p39 = scmp.ne.s32.totalorder %s24, %s38
      %p40 = scmp.eq.s32.totalorder %s19, 0
      %p41 = por %p39, %p40
      %s43 = sadd.s32 %s42, 1
      %p46 = scmp.eq.s32.totalorder %s13, 1
      %p47 = scmp.ne.s32.totalorder %s42, %s44
      %p48 = scmp.eq.s32.totalorder %s13, 0
      %p49 = por %p47, %p48
      %p50 = scmp.ne.s32.totalorder %s42, %s44
      %p51 = scmp.eq.s32.totalorder %s18, 1
      %p52 = por %p50, %p51
      %p53 = scmp.ne.s32.totalorder %s44, %s45
      %p54 = scmp.eq.s32.totalorder %s18, 0
      %p55 = por %p53, %p54
      %p56 = scmp.ne.s32.totalorder %s44, %s45
      %p57 = scmp.eq.s32.totalorder %s19, 1
      %p58 = por %p56, %p57
      %p60 = scmp.ne.s32.totalorder %s45, %s59
      %p61 = scmp.eq.s32.totalorder %s19, 0
      %p62 = por %p60, %p61
      %s64 = sadd.s32 %s63, 1
      %p67 = scmp.eq.s32.totalorder %s13, 1
      %p68 = scmp.ne.s32.totalorder %s63, %s65
      %p69 = scmp.eq.s32.totalorder %s13, 0
      %p70 = por %p68, %p69
      %p71 = scmp.ne.s32.totalorder %s63, %s65
      %p72 = scmp.eq.s32.totalorder %s18, 1
      %p73 = por %p71, %p72
      %p74 = scmp.ne.s32.totalorder %s65, %s66
      %p75 = scmp.eq.s32.totalorder %s18, 0
      %p76 = por %p74, %p75
      %p77 = scmp.ne.s32.totalorder %s65, %s66
      %p78 = scmp.eq.s32.totalorder %s19, 1
      %p79 = por %p77, %p78
      %p81 = scmp.ne.s32.totalorder %s66, %s80
      %p82 = scmp.eq.s32.totalorder %s19, 0
      %p83 = por %p81, %p82
      %s85 = sadd.s32 %s84, 1
      %p88 = scmp.eq.s32.totalorder %s13, 1
      %p89 = scmp.ne.s32.totalorder %s84, %s86
      %p90 = scmp.eq.s32.totalorder %s13, 0
      %p91 = por %p89, %p90
      %p92 = scmp.ne.s32.totalorder %s84, %s86
      %p93 = scmp.eq.s32.totalorder %s18, 1
      %p94 = por %p92, %p93
      %p95 = scmp.ne.s32.totalorder %s86, %s87
      %p96 = scmp.eq.s32.totalorder %s18, 0
      %p97 = por %p95, %p96
      %p98 = scmp.ne.s32.totalorder %s86, %s87
      %p99 = scmp.eq.s32.totalorder %s19, 1
      %p100 = por %p98, %p99
      %p102 = scmp.ne.s32.totalorder %s87, %s101
      %p103 = scmp.eq.s32.totalorder %s19, 0
      %p104 = por %p102, %p103
      %s105 = ssub.s32 %s13, %s20
      %p106 = scmp.eq.s32.totalorder %s105, 0
      %s108 = sadd.s32 %s107, 1
      %s109 = scalar_select %p106, %s107, %s108
      %p112 = pneg %p106
      %p113 = scmp.eq.s32.totalorder %s13, 1
      %p114 = por %p112, %p113
      %p115 = scmp.ne.s32.totalorder %s107, %s110
      %p116 = scmp.eq.s32.totalorder %s13, 0
      %p117 = por %p115, %p116
      %p118 = scmp.ne.s32.totalorder %s107, %s110
      %p119 = scmp.eq.s32.totalorder %s18, 1
      %p120 = por %p118, %p119
      %p121 = scmp.ne.s32.totalorder %s110, %s111
      %p122 = scmp.eq.s32.totalorder %s18, 0
      %p123 = por %p121, %p122
      %p124 = scmp.ne.s32.totalorder %s110, %s111
      %p125 = scmp.eq.s32.totalorder %s19, 1
      %p126 = por %p124, %p125
      %p128 = scmp.ne.s32.totalorder %s111, %s127
      %p129 = scmp.eq.s32.totalorder %s19, 0
      %p130 = por %p128, %p129
      %s131 = ssub.s32 %s13, %s20
      %p132 = scmp.eq.s32.totalorder %s131, 0
      %s134 = sadd.s32 %s133, 1
      %s135 = scalar_select %p132, %s133, %s134
      %p138 = pneg %p132
      %p139 = scmp.eq.s32.totalorder %s13, 1
      %p140 = por %p138, %p139
      %p141 = scmp.ne.s32.totalorder %s133, %s136
      %p142 = scmp.eq.s32.totalorder %s13, 0
      %p143 = por %p141, %p142
      %p144 = scmp.ne.s32.totalorder %s133, %s136
      %p145 = scmp.eq.s32.totalorder %s18, 1
      %p146 = por %p144, %p145
      %p147 = scmp.ne.s32.totalorder %s136, %s137
      %p148 = scmp.eq.s32.totalorder %s18, 0
      %p149 = por %p147, %p148
      %p150 = scmp.ne.s32.totalorder %s136, %s137
      %p151 = scmp.eq.s32.totalorder %s19, 1
      %p152 = por %p150, %p151
      %p154 = scmp.ne.s32.totalorder %s137, %s153
      %p155 = scmp.eq.s32.totalorder %s19, 0
      %p156 = por %p154, %p155
      %s157 = ssub.s32 %s13, %s20
      %p158 = scmp.eq.s32.totalorder %s157, 0
      %s160 = sadd.s32 %s159, 1
      %s161 = scalar_select %p158, %s159, %s160
      %p164 = pneg %p158
      %p165 = scmp.eq.s32.totalorder %s13, 1
      %p166 = por %p164, %p165
      %p167 = scmp.ne.s32.totalorder %s159, %s162
      %p168 = scmp.eq.s32.totalorder %s13, 0
      %p169 = por %p167, %p168
      %p170 = scmp.ne.s32.totalorder %s159, %s162
      %p171 = scmp.eq.s32.totalorder %s18, 1
      %p172 = por %p170, %p171
      %p173 = scmp.ne.s32.totalorder %s162, %s163
      %p174 = scmp.eq.s32.totalorder %s18, 0
      %p175 = por %p173, %p174
      %p176 = scmp.ne.s32.totalorder %s162, %s163
      %p177 = scmp.eq.s32.totalorder %s19, 1
      %p178 = por %p176, %p177
      %p180 = scmp.ne.s32.totalorder %s163, %s179
      %p181 = scmp.eq.s32.totalorder %s19, 0
      %p182 = por %p180, %p181
      %s183 = ssub.s32 %s13, %s20
      %p184 = scmp.eq.s32.totalorder %s183, 0
      %s186 = sadd.s32 %s185, 1
      %s187 = scalar_select %p184, %s185, %s186
      %p190 = pneg %p184
      %p191 = scmp.eq.s32.totalorder %s13, 1
      %p192 = por %p190, %p191
      %p193 = scmp.ne.s32.totalorder %s185, %s188
      %p194 = scmp.eq.s32.totalorder %s13, 0
      %p195 = por %p193, %p194
      %p196 = scmp.ne.s32.totalorder %s185, %s188
      %p197 = scmp.eq.s32.totalorder %s18, 1
      %p198 = por %p196, %p197
      %p199 = scmp.ne.s32.totalorder %s188, %s189
      %p200 = scmp.eq.s32.totalorder %s18, 0
      %p201 = por %p199, %p200
      %p202 = scmp.ne.s32.totalorder %s188, %s189
      %p203 = scmp.eq.s32.totalorder %s19, 1
      %p204 = por %p202, %p203
      %p206 = scmp.ne.s32.totalorder %s189, %s205
      %p207 = scmp.eq.s32.totalorder %s19, 0
      %p208 = por %p206, %p207
      %p209 = scmp.le.s32.totalorder 1, %s13
      %p210 = scmp.lt.s32.totalorder %s13, 3
      %p211 = pnand %p209, %p210
      %p212 = pneg %p211
      // Predicated region
      $region9: #{module_m_forward.1} parent=5 // pred_check
        _
      $region10: #{module_m_forward.1} parent=5 // pred_check_branch
        %214 = sbr.rel (%p211) target = $region12
      $region11: #{module_m_forward.1} parent=5 // pred_region
        %s215 = ssub.s32 %s13, 1
        // Predicated region
        $region13: #{module_m_forward.1} parent=11 // pred_check
          %p216 = pneg %p34
        $region14: #{module_m_forward.1} parent=11 // pred_check_branch
          %218 = sbr.rel (%p216) target = $region16
        $region15: #{module_m_forward.1} parent=11 // pred_region
          _
        $region16: #{module_m_forward.1} parent=11 // pred_fallthru
          _
        // Predicated region
        $region17: #{module_m_forward.1} parent=11 // pred_check
          %p219 = pneg %p55
        $region18: #{module_m_forward.1} parent=11 // pred_check_branch
          %221 = sbr.rel (%p219) target = $region20
        $region19: #{module_m_forward.1} parent=11 // pred_region
          _
        $region20: #{module_m_forward.1} parent=11 // pred_fallthru
          _
        // Predicated region
        $region21: #{module_m_forward.1} parent=11 // pred_check
          %p222 = pneg %p76
        $region22: #{module_m_forward.1} parent=11 // pred_check_branch
          %224 = sbr.rel (%p222) target = $region24
        $region23: #{module_m_forward.1} parent=11 // pred_region
          _
        $region24: #{module_m_forward.1} parent=11 // pred_fallthru
          _
        // Predicated region
        $region25: #{module_m_forward.1} parent=11 // pred_check
          %p225 = pneg %p97
        $region26: #{module_m_forward.1} parent=11 // pred_check_branch
          %227 = sbr.rel (%p225) target = $region28
        $region27: #{module_m_forward.1} parent=11 // pred_region
          _
        $region28: #{module_m_forward.1} parent=11 // pred_fallthru
          _
      $region12: #{module_m_forward.1} parent=5 // pred_fallthru
        _
      %p228 = scmp.lt.s32.totalorder %s13, 2
      // Predicated region
      $region29: #{module_m_forward.1} parent=5 // pred_check
        %p229 = pneg %p228
      $region30: #{module_m_forward.1} parent=5 // pred_check_branch
        %231 = sbr.rel (%p229) target = $region32
      $region31: #{module_m_forward.1} parent=5 // pred_region
        // Predicated region
        $region33: #{module_m_forward.1} parent=31 // pred_check
          %p232 = pneg %p117
        $region34: #{module_m_forward.1} parent=31 // pred_check_branch
          %234 = sbr.rel (%p232) target = $region36
        $region35: #{module_m_forward.1} parent=31 // pred_region
          %s235 = sand.u32 %s107, 1
          %s236 = sand.u32 %s107, 1
          %s237 = smul.addr %s236, 440
          %s238 = scalar_lea.vmem [#allocation2], %s237
          %s239 = smul.u32 2, %s13
          %s240 = smul.addr %s239, 4
          %s241 = scalar_lea.vmem %s4, %s240
          // Predicated region
          $region37: #{module_m_forward.1} parent=35 // pred_check
            _
          $region38: #{module_m_forward.1} parent=35 // pred_check_branch
            %243 = sbr.rel (0) target = $region40
          $region39: #{module_m_forward.1} parent=35 // pred_region
            // Predicated region
            $region41: #{module_m_forward.1} parent=39 // pred_check
              _
            $region42: #{module_m_forward.1} parent=39 // pred_check_branch
              %245 = sbr.rel (0) target = $region44
            $region43: #{module_m_forward.1} parent=39 // pred_region
              // Predicated region
              $region56: #{module_m_forward.1} parent=43 // pred_check
                _
              $region57: #{module_m_forward.1} parent=43 // pred_check_branch
                %368 = sbr.rel (0) target = $region59
              $region58: #{module_m_forward.1} parent=43 // pred_region
                loop: start=0, step=1, limit=1
                $region60: #{module_m_forward.1} parent=58 // loop_pre_header
                  _
                $region61: #{module_m_forward.1} parent=58 // loop_header
                  %s370 = sphi 0, %s374
                  %p371 = scmp.ge.s32.totalorder %s370, 1
                  %s375 = sphi %s241, %s241
                  %s376 = sphi %s238, %s238
                $region62: #{module_m_forward.1} parent=58 // loop_header_branch
                  %373 = sbr.rel (%p371) target = $region66
                $region63: #{module_m_forward.1} parent=58 // loop_body
                  %v377 = vld [vmem:[%s375] sm:$0xff]
                  %378 = vst [vmem:[%s376] sm:$0xff] %v377
                  %v379 = vld [vmem:[%s375 + $0x10] sm:$0xff]
                  %380 = vst [vmem:[%s376 + $0x8] sm:$0xff] %v379
                  %v381 = vld [vmem:[%s375 + $0x20] sm:$0xff]
                  %382 = vst [vmem:[%s376 + $0x10] sm:$0xff] %v381
                  %v383 = vld [vmem:[%s375 + $0x30] sm:$0xff]
                  %384 = vst [vmem:[%s376 + $0x18] sm:$0xff] %v383
                  %v385 = vld [vmem:[%s375 + $0x40] sm:$0xff]
                  %386 = vst [vmem:[%s376 + $0x20] sm:$0xff] %v385
                  %v387 = vld [vmem:[%s375 + $0x50] sm:$0xff]
                  %388 = vst [vmem:[%s376 + $0x28] sm:$0xff] %v387
                  %v389 = vld [vmem:[%s375 + $0x60] sm:$0xff]
                  %390 = vst [vmem:[%s376 + $0x30] sm:$0xff] %v389
                  %v391 = vld [vmem:[%s375 + $0x70] sm:$0xff]
                  %392 = vst [vmem:[%s376 + $0x38] sm:$0xff] %v391
                  %v393 = vld [vmem:[%s375 + $0x80] sm:$0xff]
                  %394 = vst [vmem:[%s376 + $0x40] sm:$0xff] %v393
                  %v395 = vld [vmem:[%s375 + $0x90] sm:$0xff]
                  %396 = vst [vmem:[%s376 + $0x48] sm:$0xff] %v395
                  %v397 = vld [vmem:[%s375 + $0xa0] sm:$0xff]
                  %398 = vst [vmem:[%s376 + $0x50] sm:$0xff] %v397
                  %v399 = vld [vmem:[%s375 + $0xb0] sm:$0xff]
                  %400 = vst [vmem:[%s376 + $0x58] sm:$0xff] %v399
                  %v401 = vld [vmem:[%s375 + $0xc0] sm:$0xff]
                  %402 = vst [vmem:[%s376 + $0x60] sm:$0xff] %v401
                  %v403 = vld [vmem:[%s375 + $0xd0] sm:$0xff]
                  %404 = vst [vmem:[%s376 + $0x68] sm:$0xff] %v403
                  %v405 = vld [vmem:[%s375 + $0xe0] sm:$0xff]
                  %406 = vst [vmem:[%s376 + $0x70] sm:$0xff] %v405
                  %v407 = vld [vmem:[%s375 + $0xf0] sm:$0xff]
                  %408 = vst [vmem:[%s376 + $0x78] sm:$0xff] %v407
                  %v409 = vld [vmem:[%s375 + $0x100] sm:$0xff]
                  %410 = vst [vmem:[%s376 + $0x80] sm:$0xff] %v409
                  %v411 = vld [vmem:[%s375 + $0x110] sm:$0xff]
                  %412 = vst [vmem:[%s376 + $0x88] sm:$0xff] %v411
                  %v413 = vld [vmem:[%s375 + $0x120] sm:$0xff]
                  %414 = vst [vmem:[%s376 + $0x90] sm:$0xff] %v413
                  %v415 = vld [vmem:[%s375 + $0x130] sm:$0xff]
                  %416 = vst [vmem:[%s376 + $0x98] sm:$0xff] %v415
                  %v417 = vld [vmem:[%s375 + $0x140] sm:$0xff]
                  %418 = vst [vmem:[%s376 + $0xa0] sm:$0xff] %v417
                  %v419 = vld [vmem:[%s375 + $0x150] sm:$0xff]
                  %420 = vst [vmem:[%s376 + $0xa8] sm:$0xff] %v419
                  %v421 = vld [vmem:[%s375 + $0x160] sm:$0xff]
                  %422 = vst [vmem:[%s376 + $0xb0] sm:$0xff] %v421
                  %v423 = vld [vmem:[%s375 + $0x170] sm:$0xff]
                  %424 = vst [vmem:[%s376 + $0xb8] sm:$0xff] %v423
                  %v425 = vld [vmem:[%s375 + $0x180] sm:$0xff]
                  %426 = vst [vmem:[%s376 + $0xc0] sm:$0xff] %v425
                  %v427 = vld [vmem:[%s375 + $0x190] sm:$0xff]
                  %428 = vst [vmem:[%s376 + $0xc8] sm:$0xff] %v427
                  %v429 = vld [vmem:[%s375 + $0x1a0] sm:$0xff]
                  %430 = vst [vmem:[%s376 + $0xd0] sm:$0xff] %v429
                  %v431 = vld [vmem:[%s375 + $0x1b0] sm:$0xff]
                  %432 = vst [vmem:[%s376 + $0xd8] sm:$0xff] %v431
                  %v433 = vld [vmem:[%s375 + $0x1c0] sm:$0xff]
                  %434 = vst [vmem:[%s376 + $0xe0] sm:$0xff] %v433
                  %v435 = vld [vmem:[%s375 + $0x1d0] sm:$0xff]
                  %436 = vst [vmem:[%s376 + $0xe8] sm:$0xff] %v435
                  %v437 = vld [vmem:[%s375 + $0x1e0] sm:$0xff]
                  %438 = vst [vmem:[%s376 + $0xf0] sm:$0xff] %v437
                  %v439 = vld [vmem:[%s375 + $0x1f0] sm:$0xff]
                  %440 = vst [vmem:[%s376 + $0xf8] sm:$0xff] %v439
                  %v441 = vld [vmem:[%s375 + $0x200] sm:$0xff]
                  %442 = vst [vmem:[%s376 + $0x100] sm:$0xff] %v441
                  %v443 = vld [vmem:[%s375 + $0x210] sm:$0xff]
                  %444 = vst [vmem:[%s376 + $0x108] sm:$0xff] %v443
                  %v445 = vld [vmem:[%s375 + $0x220] sm:$0xff]
                  %446 = vst [vmem:[%s376 + $0x110] sm:$0xff] %v445
                  %v447 = vld [vmem:[%s375 + $0x230] sm:$0xff]
                  %448 = vst [vmem:[%s376 + $0x118] sm:$0xff] %v447
                  %v449 = vld [vmem:[%s375 + $0x240] sm:$0xff]
                  %450 = vst [vmem:[%s376 + $0x120] sm:$0xff] %v449
                  %v451 = vld [vmem:[%s375 + $0x250] sm:$0xff]
                  %452 = vst [vmem:[%s376 + $0x128] sm:$0xff] %v451
                  %v453 = vld [vmem:[%s375 + $0x260] sm:$0xff]
                  %454 = vst [vmem:[%s376 + $0x130] sm:$0xff] %v453
                  %v455 = vld [vmem:[%s375 + $0x270] sm:$0xff]
                  %456 = vst [vmem:[%s376 + $0x138] sm:$0xff] %v455
                  %v457 = vld [vmem:[%s375 + $0x280] sm:$0xff]
                  %458 = vst [vmem:[%s376 + $0x140] sm:$0xff] %v457
                  %v459 = vld [vmem:[%s375 + $0x290] sm:$0xff]
                  %460 = vst [vmem:[%s376 + $0x148] sm:$0xff] %v459
                  %v461 = vld [vmem:[%s375 + $0x2a0] sm:$0xff]
                  %462 = vst [vmem:[%s376 + $0x150] sm:$0xff] %v461
                  %v463 = vld [vmem:[%s375 + $0x2b0] sm:$0xff]
                  %464 = vst [vmem:[%s376 + $0x158] sm:$0xff] %v463
                  %v465 = vld [vmem:[%s375 + $0x2c0] sm:$0xff]
                  %466 = vst [vmem:[%s376 + $0x160] sm:$0xff] %v465
                  %v467 = vld [vmem:[%s375 + $0x2d0] sm:$0xff]
                  %468 = vst [vmem:[%s376 + $0x168] sm:$0xff] %v467
                  %v469 = vld [vmem:[%s375 + $0x2e0] sm:$0xff]
                  %470 = vst [vmem:[%s376 + $0x170] sm:$0xff] %v469
                  %v471 = vld [vmem:[%s375 + $0x2f0] sm:$0xff]
                  %472 = vst [vmem:[%s376 + $0x178] sm:$0xff] %v471
                  %v473 = vld [vmem:[%s375 + $0x300] sm:$0xff]
                  %474 = vst [vmem:[%s376 + $0x180] sm:$0xff] %v473
                  %v475 = vld [vmem:[%s375 + $0x310] sm:$0xff]
                  %476 = vst [vmem:[%s376 + $0x188] sm:$0xff] %v475
                  %v477 = vld [vmem:[%s375 + $0x320] sm:$0xff]
                  %478 = vst [vmem:[%s376 + $0x190] sm:$0xff] %v477
                  %v479 = vld [vmem:[%s375 + $0x330] sm:$0xff]
                  %480 = vst [vmem:[%s376 + $0x198] sm:$0xff] %v479
                  %v481 = vld [vmem:[%s375 + $0x340] sm:$0xff]
                  %482 = vst [vmem:[%s376 + $0x1a0] sm:$0xff] %v481
                  %v483 = vld [vmem:[%s375 + $0x350] sm:$0xff]
                  %484 = vst [vmem:[%s376 + $0x1a8] sm:$0xff] %v483
                  %v485 = vld [vmem:[%s375 + $0x360] sm:$0xff]
                  %486 = vst [vmem:[%s376 + $0x1b0] sm:$0xff] %v485
                $region64: #{module_m_forward.1} parent=58 // loop_footer
                  %s374 = sadd.s32 1, %s370
                $region65: #{module_m_forward.1} parent=58 // loop_footer_branch
                  %369 = sbr.rel target = $region61
                $region66: #{module_m_forward.1} parent=58 // loop_exit
                  _
              $region59: #{module_m_forward.1} parent=43 // pred_fallthru
                _
              // Predicated region
              $region67: #{module_m_forward.1} parent=43 // pred_check
                _
              $region68: #{module_m_forward.1} parent=43 // pred_check_branch
                %488 = sbr.rel target = $region70
              $region69: #{module_m_forward.1} parent=43 // pred_region
                _
              $region70: #{module_m_forward.1} parent=43 // pred_fallthru
                _
            $region44: #{module_m_forward.1} parent=39 // pred_fallthru
              _
            // Predicated region
            $region45: #{module_m_forward.1} parent=39 // pred_check
              _
            $region46: #{module_m_forward.1} parent=39 // pred_check_branch
              %247 = sbr.rel target = $region48
            $region47: #{module_m_forward.1} parent=39 // pred_region
              loop: start=0, step=1, limit=1
              $region49: #{module_m_forward.1} parent=47 // loop_pre_header
                _
              $region50: #{module_m_forward.1} parent=47 // loop_header
                %s250 = sphi 0, %s254
                %p251 = scmp.ge.s32.totalorder %s250, 1
                %s255 = sphi %s241, %s241
                %s256 = sphi %s238, %s238
              $region51: #{module_m_forward.1} parent=47 // loop_header_branch
                %253 = sbr.rel (%p251) target = $region55
              $region52: #{module_m_forward.1} parent=47 // loop_body
                %v257 = vld [vmem:[%s255] sm:$0xff]
                %258 = vst [vmem:[%s256] sm:$0xff] %v257
                %v259 = vld [vmem:[%s255 + $0x10] sm:$0xff]
                %260 = vst [vmem:[%s256 + $0x8] sm:$0xff] %v259
                %v261 = vld [vmem:[%s255 + $0x20] sm:$0xff]
                %262 = vst [vmem:[%s256 + $0x10] sm:$0xff] %v261
                %v263 = vld [vmem:[%s255 + $0x30] sm:$0xff]
                %264 = vst [vmem:[%s256 + $0x18] sm:$0xff] %v263
                %v265 = vld [vmem:[%s255 + $0x40] sm:$0xff]
                %266 = vst [vmem:[%s256 + $0x20] sm:$0xff] %v265
                %v267 = vld [vmem:[%s255 + $0x50] sm:$0xff]
                %268 = vst [vmem:[%s256 + $0x28] sm:$0xff] %v267
                %v269 = vld [vmem:[%s255 + $0x60] sm:$0xff]
                %270 = vst [vmem:[%s256 + $0x30] sm:$0xff] %v269
                %v271 = vld [vmem:[%s255 + $0x70] sm:$0xff]
                %272 = vst [vmem:[%s256 + $0x38] sm:$0xff] %v271
                %v273 = vld [vmem:[%s255 + $0x80] sm:$0xff]
                %274 = vst [vmem:[%s256 + $0x40] sm:$0xff] %v273
                %v275 = vld [vmem:[%s255 + $0x90] sm:$0xff]
                %276 = vst [vmem:[%s256 + $0x48] sm:$0xff] %v275
                %v277 = vld [vmem:[%s255 + $0xa0] sm:$0xff]
                %278 = vst [vmem:[%s256 + $0x50] sm:$0xff] %v277
                %v279 = vld [vmem:[%s255 + $0xb0] sm:$0xff]
                %280 = vst [vmem:[%s256 + $0x58] sm:$0xff] %v279
                %v281 = vld [vmem:[%s255 + $0xc0] sm:$0xff]
                %282 = vst [vmem:[%s256 + $0x60] sm:$0xff] %v281
                %v283 = vld [vmem:[%s255 + $0xd0] sm:$0xff]
                %284 = vst [vmem:[%s256 + $0x68] sm:$0xff] %v283
                %v285 = vld [vmem:[%s255 + $0xe0] sm:$0xff]
                %286 = vst [vmem:[%s256 + $0x70] sm:$0xff] %v285
                %v287 = vld [vmem:[%s255 + $0xf0] sm:$0xff]
                %288 = vst [vmem:[%s256 + $0x78] sm:$0xff] %v287
                %v289 = vld [vmem:[%s255 + $0x100] sm:$0xff]
                %290 = vst [vmem:[%s256 + $0x80] sm:$0xff] %v289
                %v291 = vld [vmem:[%s255 + $0x110] sm:$0xff]
                %292 = vst [vmem:[%s256 + $0x88] sm:$0xff] %v291
                %v293 = vld [vmem:[%s255 + $0x120] sm:$0xff]
                %294 = vst [vmem:[%s256 + $0x90] sm:$0xff] %v293
                %v295 = vld [vmem:[%s255 + $0x130] sm:$0xff]
                %296 = vst [vmem:[%s256 + $0x98] sm:$0xff] %v295
                %v297 = vld [vmem:[%s255 + $0x140] sm:$0xff]
                %298 = vst [vmem:[%s256 + $0xa0] sm:$0xff] %v297
                %v299 = vld [vmem:[%s255 + $0x150] sm:$0xff]
                %300 = vst [vmem:[%s256 + $0xa8] sm:$0xff] %v299
                %v301 = vld [vmem:[%s255 + $0x160] sm:$0xff]
                %302 = vst [vmem:[%s256 + $0xb0] sm:$0xff] %v301
                %v303 = vld [vmem:[%s255 + $0x170] sm:$0xff]
                %304 = vst [vmem:[%s256 + $0xb8] sm:$0xff] %v303
                %v305 = vld [vmem:[%s255 + $0x180] sm:$0xff]
                %306 = vst [vmem:[%s256 + $0xc0] sm:$0xff] %v305
                %v307 = vld [vmem:[%s255 + $0x190] sm:$0xff]
                %308 = vst [vmem:[%s256 + $0xc8] sm:$0xff] %v307
                %v309 = vld [vmem:[%s255 + $0x1a0] sm:$0xff]
                %310 = vst [vmem:[%s256 + $0xd0] sm:$0xff] %v309
                %v311 = vld [vmem:[%s255 + $0x1b0] sm:$0xff]
                %312 = vst [vmem:[%s256 + $0xd8] sm:$0xff] %v311
                %v313 = vld [vmem:[%s255 + $0x1c0] sm:$0xff]
                %314 = vst [vmem:[%s256 + $0xe0] sm:$0xff] %v313
                %v315 = vld [vmem:[%s255 + $0x1d0] sm:$0xff]
                %316 = vst [vmem:[%s256 + $0xe8] sm:$0xff] %v315
                %v317 = vld [vmem:[%s255 + $0x1e0] sm:$0xff]
                %318 = vst [vmem:[%s256 + $0xf0] sm:$0xff] %v317
                %v319 = vld [vmem:[%s255 + $0x1f0] sm:$0xff]
                %320 = vst [vmem:[%s256 + $0xf8] sm:$0xff] %v319
                %v321 = vld [vmem:[%s255 + $0x200] sm:$0xff]
                %322 = vst [vmem:[%s256 + $0x100] sm:$0xff] %v321
                %v323 = vld [vmem:[%s255 + $0x210] sm:$0xff]
                %324 = vst [vmem:[%s256 + $0x108] sm:$0xff] %v323
                %v325 = vld [vmem:[%s255 + $0x220] sm:$0xff]
                %326 = vst [vmem:[%s256 + $0x110] sm:$0xff] %v325
                %v327 = vld [vmem:[%s255 + $0x230] sm:$0xff]
                %328 = vst [vmem:[%s256 + $0x118] sm:$0xff] %v327
                %v329 = vld [vmem:[%s255 + $0x240] sm:$0xff]
                %330 = vst [vmem:[%s256 + $0x120] sm:$0xff] %v329
                %v331 = vld [vmem:[%s255 + $0x250] sm:$0xff]
                %332 = vst [vmem:[%s256 + $0x128] sm:$0xff] %v331
                %v333 = vld [vmem:[%s255 + $0x260] sm:$0xff]
                %334 = vst [vmem:[%s256 + $0x130] sm:$0xff] %v333
                %v335 = vld [vmem:[%s255 + $0x270] sm:$0xff]
                %336 = vst [vmem:[%s256 + $0x138] sm:$0xff] %v335
                %v337 = vld [vmem:[%s255 + $0x280] sm:$0xff]
                %338 = vst [vmem:[%s256 + $0x140] sm:$0xff] %v337
                %v339 = vld [vmem:[%s255 + $0x290] sm:$0xff]
                %340 = vst [vmem:[%s256 + $0x148] sm:$0xff] %v339
                %v341 = vld [vmem:[%s255 + $0x2a0] sm:$0xff]
                %342 = vst [vmem:[%s256 + $0x150] sm:$0xff] %v341
                %v343 = vld [vmem:[%s255 + $0x2b0] sm:$0xff]
                %344 = vst [vmem:[%s256 + $0x158] sm:$0xff] %v343
                %v345 = vld [vmem:[%s255 + $0x2c0] sm:$0xff]
                %346 = vst [vmem:[%s256 + $0x160] sm:$0xff] %v345
                %v347 = vld [vmem:[%s255 + $0x2d0] sm:$0xff]
                %348 = vst [vmem:[%s256 + $0x168] sm:$0xff] %v347
                %v349 = vld [vmem:[%s255 + $0x2e0] sm:$0xff]
                %350 = vst [vmem:[%s256 + $0x170] sm:$0xff] %v349
                %v351 = vld [vmem:[%s255 + $0x2f0] sm:$0xff]
                %352 = vst [vmem:[%s256 + $0x178] sm:$0xff] %v351
                %v353 = vld [vmem:[%s255 + $0x300] sm:$0xff]
                %354 = vst [vmem:[%s256 + $0x180] sm:$0xff] %v353
                %v355 = vld [vmem:[%s255 + $0x310] sm:$0xff]
                %356 = vst [vmem:[%s256 + $0x188] sm:$0xff] %v355
                %v357 = vld [vmem:[%s255 + $0x320] sm:$0xff]
                %358 = vst [vmem:[%s256 + $0x190] sm:$0xff] %v357
                %v359 = vld [vmem:[%s255 + $0x330] sm:$0xff]
                %360 = vst [vmem:[%s256 + $0x198] sm:$0xff] %v359
                %v361 = vld [vmem:[%s255 + $0x340] sm:$0xff]
                %362 = vst [vmem:[%s256 + $0x1a0] sm:$0xff] %v361
                %v363 = vld [vmem:[%s255 + $0x350] sm:$0xff]
                %364 = vst [vmem:[%s256 + $0x1a8] sm:$0xff] %v363
                %v365 = vld [vmem:[%s255 + $0x360] sm:$0xff]
                %366 = vst [vmem:[%s256 + $0x1b0] sm:$0xff] %v365
              $region53: #{module_m_forward.1} parent=47 // loop_footer
                %s254 = sadd.s32 1, %s250
              $region54: #{module_m_forward.1} parent=47 // loop_footer_branch
                %249 = sbr.rel target = $region50
              $region55: #{module_m_forward.1} parent=47 // loop_exit
                _
            $region48: #{module_m_forward.1} parent=39 // pred_fallthru
              _
          $region40: #{module_m_forward.1} parent=35 // pred_fallthru
            _
          %489 = vnop
        $region36: #{module_m_forward.1} parent=31 // pred_fallthru
          _
        // Predicated region
        $region71: #{module_m_forward.1} parent=31 // pred_check
          %p490 = pneg %p143
        $region72: #{module_m_forward.1} parent=31 // pred_check_branch
          %492 = sbr.rel (%p490) target = $region74
        $region73: #{module_m_forward.1} parent=31 // pred_region
          %s493 = smul.u32 2, %s13
          %p494 = scmp.lt.s32.totalorder %s493, 3
          %s495 = scalar_select %p494, %s493, 3
          %s496 = scalar_lea.vmem %s5, %s495
          %s497 = smul.u32 2, %s13
        $region74: #{module_m_forward.1} parent=31 // pred_fallthru
          _
        // Predicated region
        $region75: #{module_m_forward.1} parent=31 // pred_check
          %p498 = pneg %p169
        $region76: #{module_m_forward.1} parent=31 // pred_check_branch
          %500 = sbr.rel (%p498) target = $region78
        $region77: #{module_m_forward.1} parent=31 // pred_region
          %s501 = smul.u32 2, %s13
          %p502 = scmp.lt.s32.totalorder %s501, 3
          %s503 = scalar_select %p502, %s501, 3
          %s504 = scalar_lea.vmem %s6, %s503
          %s505 = smul.u32 2, %s13
        $region78: #{module_m_forward.1} parent=31 // pred_fallthru
          _
      $region32: #{module_m_forward.1} parent=5 // pred_fallthru
        _
      %p506 = scmp.le.s32.totalorder 1, %s13
      %p507 = scmp.lt.s32.totalorder %s13, 3
      %p508 = pnand %p506, %p507
      %p509 = pneg %p508
      // Predicated region
      $region79: #{module_m_forward.1} parent=5 // pred_check
        _
      $region80: #{module_m_forward.1} parent=5 // pred_check_branch
        %511 = sbr.rel (%p508) target = $region82
      $region81: #{module_m_forward.1} parent=5 // pred_region
        %s512 = ssub.s32 %s13, 1
        %s513 = sand.u32 %s110, 1
        %s514 = sand.u32 %s110, 1
        %s515 = smul.addr %s514, 440
        %s516 = scalar_lea.vmem [#allocation2], %s515
        // Predicated region
        $region83: #{module_m_forward.1} parent=81 // pred_check
          %p517 = pneg %p123
        $region84: #{module_m_forward.1} parent=81 // pred_check_branch
          %519 = sbr.rel (%p517) target = $region86
        $region85: #{module_m_forward.1} parent=81 // pred_region
          _
        $region86: #{module_m_forward.1} parent=81 // pred_fallthru
          _
        %p520 = pneg %p34
        %p521 = pneg %p31
        %p522 = pneg %p55
        %p523 = pneg %p52
        %p524 = pneg %p76
        %p525 = pneg %p73
        %p526 = pneg %p97
        %p527 = pneg %p94
        %s528 = sand.u32 %s110, 1
        %s529 = sand.u32 %s110, 1
        %s530 = smul.addr %s529, 440
        %s531 = scalar_lea.vmem [#allocation2], %s530
        %p532 = pneg %p123
        %p533 = pneg %p120
        %s534 = smul.u32 2, %s18
        %p535 = scmp.lt.s32.totalorder %s534, 3
        %s536 = scalar_select %p535, %s534, 3
        %s537 = scalar_lea.vmem %s5, %s536
        %p538 = pneg %p149
        %p539 = pneg %p146
        %s540 = smul.u32 2, %s18
        %p541 = scmp.lt.s32.totalorder %s540, 3
        %s542 = scalar_select %p541, %s540, 3
        %s543 = scalar_lea.vmem %s6, %s542
        %p544 = pneg %p175
        %p545 = pneg %p172
        %p546 = pneg %p201
        %p547 = pneg %p198
        %s548 = sand.u32 %s188, 1
        %s549 = sand.u32 %s188, 1
        %s550 = smul.addr %s549, 112
        %s551 = scalar_lea.vmem [#allocation3], %s550
        %s552 = smul.u32 2, %s18
        %s553 = smul.u32 2, %s18
        %p554 = scmp.lt.s32.totalorder %s553, 3
        %s555 = scalar_select %p554, %s553, 3
        %s556 = scalar_lea.vmem %s5, %s555
        %s557 = smul.u32 2, %s18
        %s558 = smul.u32 2, %s18
        %p559 = scmp.lt.s32.totalorder %s558, 3
        %s560 = scalar_select %p559, %s558, 3
        %s561 = scalar_lea.vmem %s6, %s560
        %s562 = smul.u32 2, %s18
        %s563 = smul.u32 2, %s18
        %v565 = vld [vmem:[%s0] sm:$0x1]
        %v566 = vmax.f32 %v565, 0.0
        %v567 = vpack.c.bf16 %v566, %v566
        %v568 = vld [vmem:[%s1] sm:$0xff]
        %v569 = vld [vmem:[%s1 + $0x8] sm:$0xff]
        %v570 = vld [vmem:[%s1 + $0x10] sm:$0xff]
        %v571 = vld [vmem:[%s1 + $0x18] sm:$0xff]
        %v572 = vld [vmem:[%s1 + $0x20] sm:$0xff]
        %v573 = vld [vmem:[%s1 + $0x28] sm:$0xff]
        %v574 = vld [vmem:[%s1 + $0x30] sm:$0xff]
        %v575 = vld [vmem:[%s1 + $0x38] sm:$0xff]
        %v576 = vld [vmem:[%s1 + $0x40] sm:$0xff]
        %v577 = vld [vmem:[%s1 + $0x48] sm:$0xff]
        %v578 = vld [vmem:[%s1 + $0x50] sm:$0xff]
        %v579 = vld [vmem:[%s1 + $0x58] sm:$0xff]
        %v580 = vld [vmem:[%s1 + $0x60] sm:$0xff]
        %v581 = vld [vmem:[%s1 + $0x68] sm:$0xff]
        %v582 = vld [vmem:[%s1 + $0x70] sm:$0xff]
        %v583 = vld [vmem:[%s1 + $0x78] sm:$0xff]
        %v584 = vld [vmem:[%s1 + $0x80] sm:$0xff]
        %v585 = vld [vmem:[%s1 + $0x88] sm:$0xff]
        %v586 = vld [vmem:[%s1 + $0x90] sm:$0xff]
        %v587 = vld [vmem:[%s1 + $0x98] sm:$0xff]
        %v588 = vld [vmem:[%s1 + $0xa0] sm:$0xff]
        %v589 = vld [vmem:[%s1 + $0xa8] sm:$0xff]
        %v590 = vld [vmem:[%s1 + $0xb0] sm:$0xff]
        %v591 = vld [vmem:[%s1 + $0xb8] sm:$0xff]
        %v592 = vld [vmem:[%s1 + $0xc0] sm:$0xff]
        %v593 = vld [vmem:[%s1 + $0xc8] sm:$0xff]
        %v594 = vld [vmem:[%s1 + $0xd0] sm:$0x77]
        %v595 = vld [vmem:[%s1 + $0xd8] sm:$0x77]
        %v596 = vld [vmem:[%s2] sm:$0xf]
        %v625 = vunpack.c.l.b16 %v568
        %v626 = vunpack.c.h.b16 %v568
        %v627 = vunpack.c.l.b16 %v569
        %v628 = vunpack.c.h.b16 %v569
        %v629 = vunpack.c.l.b16 %v570
        %v630 = vunpack.c.h.b16 %v570
        %v631 = vunpack.c.l.b16 %v571
        %v632 = vunpack.c.h.b16 %v571
        %v633 = vunpack.c.l.b16 %v572
        %v634 = vunpack.c.h.b16 %v572
        %v635 = vunpack.c.l.b16 %v573
        %v636 = vunpack.c.h.b16 %v573
        %v637 = vunpack.c.l.b16 %v574
        %v638 = vunpack.c.h.b16 %v574
        %v639 = vunpack.c.l.b16 %v575
        %v640 = vunpack.c.h.b16 %v575
        %v641 = vunpack.c.l.b16 %v576
        %v642 = vunpack.c.h.b16 %v576
        %v643 = vunpack.c.l.b16 %v577
        %v644 = vunpack.c.h.b16 %v577
        %v645 = vunpack.c.l.b16 %v578
        %v646 = vunpack.c.h.b16 %v578
        %v647 = vunpack.c.l.b16 %v579
        %v648 = vunpack.c.h.b16 %v579
        %v649 = vunpack.c.l.b16 %v580
        %v650 = vunpack.c.h.b16 %v580
        %v651 = vunpack.c.l.b16 %v581
        %v652 = vunpack.c.h.b16 %v581
        %v653 = vunpack.c.l.b16 %v582
        %v654 = vunpack.c.h.b16 %v582
        %v655 = vunpack.c.l.b16 %v583
        %v656 = vunpack.c.h.b16 %v583
        %v657 = vunpack.c.l.b16 %v584
        %v658 = vunpack.c.h.b16 %v584
        %v659 = vunpack.c.l.b16 %v585
        %v660 = vunpack.c.h.b16 %v585
        %v661 = vunpack.c.l.b16 %v586
        %v662 = vunpack.c.h.b16 %v586
        %v663 = vunpack.c.l.b16 %v587
        %v664 = vunpack.c.h.b16 %v587
        %v665 = vunpack.c.l.b16 %v588
        %v666 = vunpack.c.h.b16 %v588
        %v667 = vunpack.c.l.b16 %v589
        %v668 = vunpack.c.h.b16 %v589
        %v669 = vunpack.c.l.b16 %v590
        %v670 = vunpack.c.h.b16 %v590
        %v671 = vunpack.c.l.b16 %v591
        %v672 = vunpack.c.h.b16 %v591
        %v673 = vunpack.c.l.b16 %v592
        %v674 = vunpack.c.h.b16 %v592
        %v675 = vunpack.c.l.b16 %v593
        %v676 = vunpack.c.h.b16 %v593
        %v677 = vunpack.c.l.b16 %v594
        %v678 = vunpack.c.h.b16 %v594
        %v679 = vunpack.c.l.b16 %v595
        %v680 = vunpack.c.h.b16 %v595
        %v681 = vpack.c.b16 %v629, %v625
        %v682 = vpack.c.b16 %v630, %v626
        %v683 = vpack.c.b16 %v631, %v627
        %v684 = vpack.c.b16 %v632, %v628
        %v685 = vpack.c.b16 %v637, %v633
        %v686 = vpack.c.b16 %v638, %v634
        %v687 = vpack.c.b16 %v639, %v635
        %v688 = vpack.c.b16 %v640, %v636
        %v689 = vpack.c.b16 %v645, %v641
        %v690 = vpack.c.b16 %v646, %v642
        %v691 = vpack.c.b16 %v647, %v643
        %v692 = vpack.c.b16 %v648, %v644
        %v693 = vpack.c.b16 %v653, %v649
        %v694 = vpack.c.b16 %v654, %v650
        %v695 = vpack.c.b16 %v655, %v651
        %v696 = vpack.c.b16 %v656, %v652
        %v697 = vpack.c.b16 %v661, %v657
        %v698 = vpack.c.b16 %v662, %v658
        %v699 = vpack.c.b16 %v663, %v659
        %v700 = vpack.c.b16 %v664, %v660
        %v701 = vpack.c.b16 %v669, %v665
        %v702 = vpack.c.b16 %v670, %v666
        %v703 = vpack.c.b16 %v671, %v667
        %v704 = vpack.c.b16 %v672, %v668
        %v705 = vpack.c.b16 %v677, %v673
        %v706 = vpack.c.b16 %v678, %v674
        %v707 = vpack.c.b16 %v679, %v675
        %v708 = vpack.c.b16 %v680, %v676
        %v734 = vlaneseq
        %v735 = vshrl.u32 %v734, 7
        %v736 = vsub.s32 0, %v735
        %v737 = vrot.slane %v596, %v736
        %v738 = vlaneseq
        %v739 = vshrl.u32 %v738, 7
        %v740 = vsub.s32 1, %v739
        %v741 = vrot.slane %v596, %v740
        %v742 = vlaneseq
        %v743 = vshrl.u32 %v742, 7
        %v744 = vsub.s32 2, %v743
        %v745 = vrot.slane %v596, %v744
        %v746 = vlaneseq
        %v747 = vshrl.u32 %v746, 7
        %v748 = vsub.s32 3, %v747
        %v749 = vrot.slane %v596, %v748
        %vm754 = vcmask 900096
        %v756 = vsel %vm754, %v567, 0
        %vm758 = vcmask 1046528
        %v760 = vsel %vm758, %v705, 0
        %v763 = vsel %vm758, %v706, 0
        %v766 = vsel %vm758, %v707, 0
        %v769 = vsel %vm758, %v708, 0
        %771 = vmatprep.subr.bf16.mxu0 %v682
        %772 = vmatpush1.bf16.msra.mxu0 %v681
        %773 = vmatprep.subr.bf16.mxu0 %v686
        %774 = vmatpush1.bf16.msra.mxu0 %v685
        %775 = vmatprep.subr.bf16.mxu0 %v690
        %776 = vmatpush1.bf16.msra.mxu0 %v689
        %777 = vmatprep.subr.bf16.mxu0 %v694
        %778 = vmatpush1.bf16.msra.mxu0 %v693
        %779 = vmatprep.subr.bf16.mxu0 %v698
        %780 = vmatpush1.bf16.msra.mxu0 %v697
        %781 = vmatprep.subr.bf16.mxu0 %v702
        %782 = vmatpush1.bf16.msra.mxu0 %v701
        %783 = vmatprep.subr.bf16.mxu0 %v763
        %784 = vmatpush1.bf16.msra.mxu0 %v760
        %785 = vmatprep.subr.bf16.mxu0 0
        %786 = vmatpush1.bf16.msra.mxu0 0
        %787 = vmatprep.subr.bf16.mxu0 0
        %788 = vmatpush1.bf16.msra.mxu0 0
        %789 = vmatprep.subr.bf16.mxu0 0
        %790 = vmatpush1.bf16.msra.mxu0 0
        %791 = vmatprep.subr.bf16.mxu0 0
        %792 = vmatpush1.bf16.msra.mxu0 0
        %793 = vmatprep.subr.bf16.mxu0 0
        %794 = vmatpush1.bf16.msra.mxu0 0
        %795 = vmatprep.subr.bf16.mxu0 0
        %796 = vmatpush1.bf16.msra.mxu0 0
        %797 = vmatprep.subr.bf16.mxu0 0
        %798 = vmatpush1.bf16.msra.mxu0 0
        %799 = vmatprep.subr.bf16.mxu0 0
        %800 = vmatpush1.bf16.msra.mxu0 0
        %801 = vmatprep.subr.bf16.mxu0 0
        %802 = vmatpush1.bf16.msra.mxu0 0
        %803 = vmatprep.mubr.bf16.mxu0 0
        %804 = vmatmul.mubr.bf16.gmra.mrb[0].mxu0 %v756
        %v805 = vpop.f32.mrb[0].mxu0
        %v806 = vadd.f32 %v737, %v805
        %v807 = vpop.f32.mrb[0].mxu0
        %v808 = vadd.f32 %v741, %v807
        %v809 = vpop.f32.mrb[0].mxu0
        %v810 = vpop.f32.mrb[0].mxu0
        %811 = vdwg.mxu0
        %812 = vmatprep.subr.bf16.mxu0 %v684
        %813 = vmatpush1.bf16.msra.mxu0 %v683
        %814 = vmatprep.subr.bf16.mxu0 %v688
        %815 = vmatpush1.bf16.msra.mxu0 %v687
        %816 = vmatprep.subr.bf16.mxu0 %v692
        %817 = vmatpush1.bf16.msra.mxu0 %v691
        %818 = vmatprep.subr.bf16.mxu0 %v696
        %819 = vmatpush1.bf16.msra.mxu0 %v695
        %820 = vmatprep.subr.bf16.mxu0 %v700
        %821 = vmatpush1.bf16.msra.mxu0 %v699
        %822 = vmatprep.subr.bf16.mxu0 %v704
        %823 = vmatpush1.bf16.msra.mxu0 %v703
        %824 = vmatprep.subr.bf16.mxu0 %v769
        %825 = vmatpush1.bf16.msra.mxu0 %v766
        %826 = vmatprep.subr.bf16.mxu0 0
        %827 = vmatpush1.bf16.msra.mxu0 0
        %828 = vmatprep.subr.bf16.mxu0 0
        %829 = vmatpush1.bf16.msra.mxu0 0
        %830 = vmatprep.subr.bf16.mxu0 0
        %831 = vmatpush1.bf16.msra.mxu0 0
        %832 = vmatprep.subr.bf16.mxu0 0
        %833 = vmatpush1.bf16.msra.mxu0 0
        %834 = vmatprep.subr.bf16.mxu0 0
        %835 = vmatpush1.bf16.msra.mxu0 0
        %836 = vmatprep.subr.bf16.mxu0 0
        %837 = vmatpush1.bf16.msra.mxu0 0
        %838 = vmatprep.subr.bf16.mxu0 0
        %839 = vmatpush1.bf16.msra.mxu0 0
        %840 = vmatprep.subr.bf16.mxu0 0
        %841 = vmatpush1.bf16.msra.mxu0 0
        %842 = vmatprep.subr.bf16.mxu0 0
        %843 = vmatpush1.bf16.msra.mxu0 0
        %844 = vmatprep.mubr.bf16.mxu0 0
        %845 = vmatmul.mubr.bf16.gmra.mrb[0].mxu0 %v756
        %v846 = vpop.f32.mrb[0].mxu0
        %v847 = vadd.f32 %v745, %v846
        %v848 = vpop.f32.mrb[0].mxu0
        %v849 = vadd.f32 %v749, %v848
        %v850 = vpop.f32.mrb[0].mxu0
        %v851 = vpop.f32.mrb[0].mxu0
        %852 = vdwg.mxu0
        %v853 = vxor.u32 %v806, 2147483648
        %v854 = vxor.u32 %v808, 2147483648
        %v855 = vxor.u32 %v847, 2147483648
        %v856 = vxor.u32 %v849, 2147483648
        %v857 = vmul.f32 %v853, 1.442695
        %v858 = vpow.pop %v857
        %v859 = vmul.f32 %v854, 1.442695
        %v860 = vpow.pop %v859
        %v861 = vmul.f32 %v855, 1.442695
        %v862 = vpow.pop %v861
        %v863 = vmul.f32 %v856, 1.442695
        %v864 = vpow.pop %v863
        %v865 = vadd.f32 %v858, 1.0
        %v866 = vadd.f32 %v860, 1.0
        %v867 = vadd.f32 %v862, 1.0
        %v868 = vadd.f32 %v864, 1.0
        %v869 = vrcp.pop %v865
        %v870 = vmul.f32 1.0, %v869
        %v871 = vrcp.pop %v866
        %v872 = vmul.f32 1.0, %v871
        %v873 = vrcp.pop %v867
        %v874 = vmul.f32 1.0, %v873
        %v875 = vrcp.pop %v868
        %v876 = vmul.f32 1.0, %v875
        %v877 = vld [vmem:[%s3] sm:$0xff]
        %v878 = vld [vmem:[%s3 + $0x8] sm:$0xff]
        %v879 = vld [vmem:[%s3 + $0x10] sm:$0xff]
        %v880 = vld [vmem:[%s3 + $0x18] sm:$0xff]
        %v881 = vld [vmem:[%s3 + $0x20] sm:$0xff]
        %v882 = vld [vmem:[%s3 + $0x28] sm:$0xff]
        %v883 = vld [vmem:[%s3 + $0x30] sm:$0xff]
        %v884 = vld [vmem:[%s3 + $0x38] sm:$0xff]
        %v885 = vld [vmem:[%s3 + $0x40] sm:$0xff]
        %v886 = vld [vmem:[%s3 + $0x48] sm:$0xff]
        %v887 = vld [vmem:[%s3 + $0x50] sm:$0xff]
        %v888 = vld [vmem:[%s3 + $0x58] sm:$0xff]
        %v889 = vld [vmem:[%s3 + $0x60] sm:$0xff]
        %v890 = vld [vmem:[%s3 + $0x68] sm:$0xff]
        %v891 = vld [vmem:[%s3 + $0x70] sm:$0xff]
        %v892 = vld [vmem:[%s3 + $0x78] sm:$0xff]
        %v893 = vld [vmem:[%s3 + $0x80] sm:$0xff]
        %v894 = vld [vmem:[%s3 + $0x88] sm:$0xff]
        %v895 = vld [vmem:[%s3 + $0x90] sm:$0xff]
        %v896 = vld [vmem:[%s3 + $0x98] sm:$0xff]
        %v897 = vld [vmem:[%s3 + $0xa0] sm:$0xff]
        %v898 = vld [vmem:[%s3 + $0xa8] sm:$0xff]
        %v899 = vld [vmem:[%s3 + $0xb0] sm:$0xff]
        %v900 = vld [vmem:[%s3 + $0xb8] sm:$0xff]
        %v901 = vld [vmem:[%s3 + $0xc0] sm:$0x1]
        %v902 = vld [vmem:[%s3 + $0xc8] sm:$0x1]
        %v903 = vld [vmem:[%s3 + $0xd0] sm:$0x1]
        %v904 = vld [vmem:[%s3 + $0xd8] sm:$0x1]
        %v905 = vlaneseq
        %v906 = vshrl.u32 %v905, 7
        %v907 = vsub.s32 0, %v906
        %v908 = vrot.slane %v870, %v907
        %v909 = vlaneseq
        %v910 = vshrl.u32 %v909, 7
        %v911 = vsub.s32 0, %v910
        %v912 = vrot.slane %v872, %v911
        %v913 = vlaneseq
        %v914 = vshrl.u32 %v913, 7
        %v915 = vsub.s32 0, %v914
        %v916 = vrot.slane %v874, %v915
        %v917 = vlaneseq
        %v918 = vshrl.u32 %v917, 7
        %v919 = vsub.s32 0, %v918
        %v920 = vrot.slane %v876, %v919
        %v921 = vmul.f32 %v877, %v908
        %v922 = vmul.f32 %v878, %v912
        %v923 = vmul.f32 %v879, %v916
        %v924 = vmul.f32 %v880, %v920
        %v925 = vmul.f32 %v881, %v908
        %v926 = vmul.f32 %v882, %v912
        %v927 = vmul.f32 %v883, %v916
        %v928 = vmul.f32 %v884, %v920
        %v929 = vmul.f32 %v885, %v908
        %v930 = vmul.f32 %v886, %v912
        %v931 = vmul.f32 %v887, %v916
        %v932 = vmul.f32 %v888, %v920
        %v933 = vmul.f32 %v889, %v908
        %v934 = vmul.f32 %v890, %v912
        %v935 = vmul.f32 %v891, %v916
        %v936 = vmul.f32 %v892, %v920
        %v937 = vmul.f32 %v893, %v908
        %v938 = vmul.f32 %v894, %v912
        %v939 = vmul.f32 %v895, %v916
        %v940 = vmul.f32 %v896, %v920
        %v941 = vmul.f32 %v897, %v908
        %v942 = vmul.f32 %v898, %v912
        %v943 = vmul.f32 %v899, %v916
        %v944 = vmul.f32 %v900, %v920
        %v945 = vmul.f32 %v901, %v908
        %v946 = vmul.f32 %v902, %v912
        %v947 = vmul.f32 %v903, %v916
        %v948 = vmul.f32 %v904, %v920
        %v949 = vpack.c.bf16 %v925, %v921
        %v950 = vpack.c.bf16 %v926, %v922
        %v951 = vpack.c.bf16 %v927, %v923
        %v952 = vpack.c.bf16 %v928, %v924
        %v953 = vpack.c.bf16 %v933, %v929
        %v954 = vpack.c.bf16 %v934, %v930
        %v955 = vpack.c.bf16 %v935, %v931
        %v956 = vpack.c.bf16 %v936, %v932
        %v957 = vpack.c.bf16 %v941, %v937
        %v958 = vpack.c.bf16 %v942, %v938
        %v959 = vpack.c.bf16 %v943, %v939
        %v960 = vpack.c.bf16 %v944, %v940
        %v961 = vpack.c.bf16 %v945, %v945
        %v962 = vpack.c.bf16 %v946, %v946
        %v963 = vpack.c.bf16 %v947, %v947
        %v964 = vpack.c.bf16 %v948, %v948
        %v965 = vld [vmem:[%s516] sm:$0xff]
        %v966 = vld [vmem:[%s516 + $0x8] sm:$0xff]
        %v967 = vld [vmem:[%s516 + $0x10] sm:$0xff]
        %v968 = vld [vmem:[%s516 + $0x18] sm:$0xff]
        %v969 = vld [vmem:[%s516 + $0x20] sm:$0xff]
        %v970 = vld [vmem:[%s516 + $0x28] sm:$0xff]
        %v971 = vld [vmem:[%s516 + $0x30] sm:$0xff]
        %v972 = vld [vmem:[%s516 + $0x38] sm:$0xff]
        %v973 = vld [vmem:[%s516 + $0x40] sm:$0xff]
        %v974 = vld [vmem:[%s516 + $0x48] sm:$0xff]
        %v975 = vld [vmem:[%s516 + $0x50] sm:$0xff]
        %v976 = vld [vmem:[%s516 + $0x58] sm:$0xff]
        %v977 = vld [vmem:[%s516 + $0x60] sm:$0xff]
        %v978 = vld [vmem:[%s516 + $0x68] sm:$0xff]
        %v979 = vld [vmem:[%s516 + $0x70] sm:$0xff]
        %v980 = vld [vmem:[%s516 + $0x78] sm:$0xff]
        %v981 = vld [vmem:[%s516 + $0x80] sm:$0xff]
        %v982 = vld [vmem:[%s516 + $0x88] sm:$0xff]
        %v983 = vld [vmem:[%s516 + $0x90] sm:$0xff]
        %v984 = vld [vmem:[%s516 + $0x98] sm:$0xff]
        %v985 = vld [vmem:[%s516 + $0xa0] sm:$0xff]
        %v986 = vld [vmem:[%s516 + $0xa8] sm:$0xff]
        %v987 = vld [vmem:[%s516 + $0xb0] sm:$0xff]
        %v988 = vld [vmem:[%s516 + $0xb8] sm:$0xff]
        %v989 = vld [vmem:[%s516 + $0xc0] sm:$0xff]
        %v990 = vld [vmem:[%s516 + $0xc8] sm:$0xff]
        %v991 = vld [vmem:[%s516 + $0xd0] sm:$0xff]
        %v992 = vld [vmem:[%s516 + $0xd8] sm:$0xff]
        %v993 = vld [vmem:[%s516 + $0xe0] sm:$0xff]
        %v994 = vld [vmem:[%s516 + $0xe8] sm:$0xff]
        %v995 = vld [vmem:[%s516 + $0xf0] sm:$0xff]
        %v996 = vld [vmem:[%s516 + $0xf8] sm:$0xff]
        %v997 = vld [vmem:[%s516 + $0x100] sm:$0xff]
        %v998 = vld [vmem:[%s516 + $0x108] sm:$0xff]
        %v999 = vld [vmem:[%s516 + $0x110] sm:$0xff]
        %v1000 = vld [vmem:[%s516 + $0x118] sm:$0xff]
        %v1001 = vld [vmem:[%s516 + $0x120] sm:$0xff]
        %v1002 = vld [vmem:[%s516 + $0x128] sm:$0xff]
        %v1003 = vld [vmem:[%s516 + $0x130] sm:$0xff]
        %v1004 = vld [vmem:[%s516 + $0x138] sm:$0xff]
        %v1005 = vld [vmem:[%s516 + $0x140] sm:$0xff]
        %v1006 = vld [vmem:[%s516 + $0x148] sm:$0xff]
        %v1007 = vld [vmem:[%s516 + $0x150] sm:$0xff]
        %v1008 = vld [vmem:[%s516 + $0x158] sm:$0xff]
        %v1009 = vld [vmem:[%s516 + $0x160] sm:$0xff]
        %v1010 = vld [vmem:[%s516 + $0x168] sm:$0xff]
        %v1011 = vld [vmem:[%s516 + $0x170] sm:$0xff]
        %v1012 = vld [vmem:[%s516 + $0x178] sm:$0xff]
        %v1013 = vld [vmem:[%s516 + $0x180] sm:$0xff]
        %v1014 = vld [vmem:[%s516 + $0x188] sm:$0xff]
        %v1015 = vld [vmem:[%s516 + $0x190] sm:$0xff]
        %v1016 = vld [vmem:[%s516 + $0x198] sm:$0xff]
        %v1017 = vld [vmem:[%s516 + $0x1a0] sm:$0xff]
        %v1018 = vld [vmem:[%s516 + $0x1a8] sm:$0xff]
        %v1019 = vld [vmem:[%s516 + $0x1b0] sm:$0xff]
        %v1075 = vunpack.c.l.b16 %v965
        %v1076 = vunpack.c.h.b16 %v965
        %v1077 = vunpack.c.l.b16 %v966
        %v1078 = vunpack.c.h.b16 %v966
        %v1079 = vunpack.c.l.b16 %v967
        %v1080 = vunpack.c.h.b16 %v967
        %v1081 = vunpack.c.l.b16 %v968
        %v1082 = vunpack.c.h.b16 %v968
        %v1083 = vunpack.c.l.b16 %v969
        %v1084 = vunpack.c.h.b16 %v969
        %v1085 = vunpack.c.l.b16 %v970
        %v1086 = vunpack.c.h.b16 %v970
        %v1087 = vunpack.c.l.b16 %v971
        %v1088 = vunpack.c.h.b16 %v971
        %v1089 = vunpack.c.l.b16 %v972
        %v1090 = vunpack.c.h.b16 %v972
        %v1091 = vunpack.c.l.b16 %v973
        %v1092 = vunpack.c.h.b16 %v973
        %v1093 = vunpack.c.l.b16 %v974
        %v1094 = vunpack.c.h.b16 %v974
        %v1095 = vunpack.c.l.b16 %v975
        %v1096 = vunpack.c.h.b16 %v975
        %v1097 = vunpack.c.l.b16 %v976
        %v1098 = vunpack.c.h.b16 %v976
        %v1099 = vunpack.c.l.b16 %v977
        %v1100 = vunpack.c.h.b16 %v977
        %v1101 = vunpack.c.l.b16 %v978
        %v1102 = vunpack.c.h.b16 %v978
        %v1103 = vunpack.c.l.b16 %v979
        %v1104 = vunpack.c.h.b16 %v979
        %v1105 = vunpack.c.l.b16 %v980
        %v1106 = vunpack.c.h.b16 %v980
        %v1107 = vunpack.c.l.b16 %v981
        %v1108 = vunpack.c.h.b16 %v981
        %v1109 = vunpack.c.l.b16 %v982
        %v1110 = vunpack.c.h.b16 %v982
        %v1111 = vunpack.c.l.b16 %v983
        %v1112 = vunpack.c.h.b16 %v983
        %v1113 = vunpack.c.l.b16 %v984
        %v1114 = vunpack.c.h.b16 %v984
        %v1115 = vunpack.c.l.b16 %v985
        %v1116 = vunpack.c.h.b16 %v985
        %v1117 = vunpack.c.l.b16 %v986
        %v1118 = vunpack.c.h.b16 %v986
        %v1119 = vunpack.c.l.b16 %v987
        %v1120 = vunpack.c.h.b16 %v987
        %v1121 = vunpack.c.l.b16 %v988
        %v1122 = vunpack.c.h.b16 %v988
        %v1123 = vunpack.c.l.b16 %v989
        %v1124 = vunpack.c.h.b16 %v989
        %v1125 = vunpack.c.l.b16 %v990
        %v1126 = vunpack.c.h.b16 %v990
        %v1127 = vunpack.c.l.b16 %v991
        %v1128 = vunpack.c.h.b16 %v991
        %v1129 = vunpack.c.l.b16 %v992
        %v1130 = vunpack.c.h.b16 %v992
        %v1131 = vunpack.c.l.b16 %v993
        %v1132 = vunpack.c.h.b16 %v993
        %v1133 = vunpack.c.l.b16 %v994
        %v1134 = vunpack.c.h.b16 %v994
        %v1135 = vunpack.c.l.b16 %v995
        %v1136 = vunpack.c.h.b16 %v995
        %v1137 = vunpack.c.l.b16 %v996
        %v1138 = vunpack.c.h.b16 %v996
        %v1139 = vunpack.c.l.b16 %v997
        %v1140 = vunpack.c.h.b16 %v997
        %v1141 = vunpack.c.l.b16 %v998
        %v1142 = vunpack.c.h.b16 %v998
        %v1143 = vunpack.c.l.b16 %v999
        %v1144 = vunpack.c.h.b16 %v999
        %v1145 = vunpack.c.l.b16 %v1000
        %v1146 = vunpack.c.h.b16 %v1000
        %v1147 = vunpack.c.l.b16 %v1001
        %v1148 = vunpack.c.h.b16 %v1001
        %v1149 = vunpack.c.l.b16 %v1002
        %v1150 = vunpack.c.h.b16 %v1002
        %v1151 = vunpack.c.l.b16 %v1003
        %v1152 = vunpack.c.h.b16 %v1003
        %v1153 = vunpack.c.l.b16 %v1004
        %v1154 = vunpack.c.h.b16 %v1004
        %v1155 = vunpack.c.l.b16 %v1005
        %v1156 = vunpack.c.h.b16 %v1005
        %v1157 = vunpack.c.l.b16 %v1006
        %v1158 = vunpack.c.h.b16 %v1006
        %v1159 = vunpack.c.l.b16 %v1007
        %v1160 = vunpack.c.h.b16 %v1007
        %v1161 = vunpack.c.l.b16 %v1008
        %v1162 = vunpack.c.h.b16 %v1008
        %v1163 = vunpack.c.l.b16 %v1009
        %v1164 = vunpack.c.h.b16 %v1009
        %v1165 = vunpack.c.l.b16 %v1010
        %v1166 = vunpack.c.h.b16 %v1010
        %v1167 = vunpack.c.l.b16 %v1011
        %v1168 = vunpack.c.h.b16 %v1011
        %v1169 = vunpack.c.l.b16 %v1012
        %v1170 = vunpack.c.h.b16 %v1012
        %v1171 = vunpack.c.l.b16 %v1013
        %v1172 = vunpack.c.h.b16 %v1013
        %v1173 = vunpack.c.l.b16 %v1014
        %v1174 = vunpack.c.h.b16 %v1014
        %v1175 = vunpack.c.l.b16 %v1015
        %v1176 = vunpack.c.h.b16 %v1015
        %v1177 = vunpack.c.l.b16 %v1016
        %v1178 = vunpack.c.h.b16 %v1016
        %v1179 = vunpack.c.l.b16 %v1017
        %v1180 = vunpack.c.h.b16 %v1017
        %v1181 = vunpack.c.l.b16 %v1018
        %v1182 = vunpack.c.h.b16 %v1018
        %v1183 = vunpack.c.l.b16 %v1019
        %v1184 = vunpack.c.h.b16 %v1019
        %v1185 = vpack.c.b16 %v1077, %v1075
        %v1186 = vpack.c.b16 %v1078, %v1076
        %v1187 = vpack.c.b16 %v1081, %v1079
        %v1188 = vpack.c.b16 %v1082, %v1080
        %v1189 = vpack.c.b16 %v1085, %v1083
        %v1190 = vpack.c.b16 %v1086, %v1084
        %v1191 = vpack.c.b16 %v1089, %v1087
        %v1192 = vpack.c.b16 %v1090, %v1088
        %v1193 = vpack.c.b16 %v1093, %v1091
        %v1194 = vpack.c.b16 %v1094, %v1092
        %v1195 = vpack.c.b16 %v1097, %v1095
        %v1196 = vpack.c.b16 %v1098, %v1096
        %v1197 = vpack.c.b16 %v1101, %v1099
        %v1198 = vpack.c.b16 %v1102, %v1100
        %v1199 = vpack.c.b16 %v1105, %v1103
        %v1200 = vpack.c.b16 %v1106, %v1104
        %v1201 = vpack.c.b16 %v1109, %v1107
        %v1202 = vpack.c.b16 %v1110, %v1108
        %v1203 = vpack.c.b16 %v1113, %v1111
        %v1204 = vpack.c.b16 %v1114, %v1112
        %v1205 = vpack.c.b16 %v1117, %v1115
        %v1206 = vpack.c.b16 %v1118, %v1116
        %v1207 = vpack.c.b16 %v1121, %v1119
        %v1208 = vpack.c.b16 %v1122, %v1120
        %v1209 = vpack.c.b16 %v1125, %v1123
        %v1210 = vpack.c.b16 %v1126, %v1124
        %v1211 = vpack.c.b16 %v1129, %v1127
        %v1212 = vpack.c.b16 %v1130, %v1128
        %v1213 = vpack.c.b16 %v1133, %v1131
        %v1214 = vpack.c.b16 %v1134, %v1132
        %v1215 = vpack.c.b16 %v1137, %v1135
        %v1216 = vpack.c.b16 %v1138, %v1136
        %v1217 = vpack.c.b16 %v1141, %v1139
        %v1218 = vpack.c.b16 %v1142, %v1140
        %v1219 = vpack.c.b16 %v1145, %v1143
        %v1220 = vpack.c.b16 %v1146, %v1144
        %v1221 = vpack.c.b16 %v1149, %v1147
        %v1222 = vpack.c.b16 %v1150, %v1148
        %v1223 = vpack.c.b16 %v1153, %v1151
        %v1224 = vpack.c.b16 %v1154, %v1152
        %v1225 = vpack.c.b16 %v1157, %v1155
        %v1226 = vpack.c.b16 %v1158, %v1156
        %v1227 = vpack.c.b16 %v1161, %v1159
        %v1228 = vpack.c.b16 %v1162, %v1160
        %v1229 = vpack.c.b16 %v1165, %v1163
        %v1230 = vpack.c.b16 %v1166, %v1164
        %v1231 = vpack.c.b16 %v1169, %v1167
        %v1232 = vpack.c.b16 %v1170, %v1168
        %v1233 = vpack.c.b16 %v1173, %v1171
        %v1234 = vpack.c.b16 %v1174, %v1172
        %v1235 = vpack.c.b16 %v1177, %v1175
        %v1236 = vpack.c.b16 %v1178, %v1176
        %v1237 = vpack.c.b16 %v1181, %v1179
        %v1238 = vpack.c.b16 %v1182, %v1180
        %v1239 = vpack.c.b16 %v1183, %v1183
        %v1240 = vpack.c.b16 %v1184, %v1184
        %vm1295 = vcmask 457728
        %v1297 = vsel %vm1295, %v952, 0
        %v1300 = vsel %vm1295, %v956, 0
        %v1303 = vsel %vm1295, %v960, 0
        %v1306 = vsel %vm1295, %v964, 0
        %vm1308 = vcmask 1043456
        %v1310 = vsel %vm1308, %v1239, 0
        %v1313 = vsel %vm1308, %v1240, 0
        %1315 = vmatprep.subr.bf16.mxu0 %v1186
        %1316 = vmatpush1.bf16.msra.mxu0 %v1185
        %1317 = vmatprep.subr.bf16.mxu0 %v1188
        %1318 = vmatpush1.bf16.msra.mxu0 %v1187
        %1319 = vmatprep.subr.bf16.mxu0 %v1190
        %1320 = vmatpush1.bf16.msra.mxu0 %v1189
        %1321 = vmatprep.subr.bf16.mxu0 %v1192
        %1322 = vmatpush1.bf16.msra.mxu0 %v1191
        %1323 = vmatprep.subr.bf16.mxu0 %v1194
        %1324 = vmatpush1.bf16.msra.mxu0 %v1193
        %1325 = vmatprep.subr.bf16.mxu0 %v1196
        %1326 = vmatpush1.bf16.msra.mxu0 %v1195
        %1327 = vmatprep.subr.bf16.mxu0 %v1198
        %1328 = vmatpush1.bf16.msra.mxu0 %v1197
        %1329 = vmatprep.subr.bf16.mxu0 %v1200
        %1330 = vmatpush1.bf16.msra.mxu0 %v1199
        %1331 = vmatprep.subr.bf16.mxu0 %v1202
        %1332 = vmatpush1.bf16.msra.mxu0 %v1201
        %1333 = vmatprep.subr.bf16.mxu0 %v1204
        %1334 = vmatpush1.bf16.msra.mxu0 %v1203
        %1335 = vmatprep.subr.bf16.mxu0 %v1206
        %1336 = vmatpush1.bf16.msra.mxu0 %v1205
        %1337 = vmatprep.subr.bf16.mxu0 %v1208
        %1338 = vmatpush1.bf16.msra.mxu0 %v1207
        %1339 = vmatprep.subr.bf16.mxu0 %v1210
        %1340 = vmatpush1.bf16.msra.mxu0 %v1209
        %1341 = vmatprep.subr.bf16.mxu0 %v1212
        %1342 = vmatpush1.bf16.msra.mxu0 %v1211
        %1343 = vmatprep.subr.bf16.mxu0 %v1214
        %1344 = vmatpush1.bf16.msra.mxu0 %v1213
        %1345 = vmatprep.subr.bf16.mxu0 %v1216
        %1346 = vmatpush1.bf16.msra.mxu0 %v1215
        %1347 = vmatprep.mubr.bf16.mxu0 %v950
        %1348 = vmatmul.mubr.bf16.gmra.mrb[0].mxu0 %v949
        %v1349 = vpop.f32.mrb[0].mxu0
        %v1350 = vadd.f32 0.0, %v1349
        %v1351 = vpop.f32.mrb[0].mxu0
        %v1352 = vadd.f32 0.0, %v1351
        %v1353 = vpop.f32.mrb[0].mxu0
        %v1354 = vadd.f32 0.0, %v1353
        %v1355 = vpop.f32.mrb[0].mxu0
        %v1356 = vadd.f32 0.0, %v1355
        %1357 = vmatprep.mubr.bf16.mxu0 %v954
        %1358 = vmatmul.mubr.bf16.gmra.mrb[0].mxu0 %v953
        %v1359 = vpop.f32.mrb[0].mxu0
        %v1360 = vadd.f32 0.0, %v1359
        %v1361 = vpop.f32.mrb[0].mxu0
        %v1362 = vadd.f32 0.0, %v1361
        %v1363 = vpop.f32.mrb[0].mxu0
        %v1364 = vadd.f32 0.0, %v1363
        %v1365 = vpop.f32.mrb[0].mxu0
        %v1366 = vadd.f32 0.0, %v1365
        %1367 = vmatprep.mubr.bf16.mxu0 %v958
        %1368 = vmatmul.mubr.bf16.gmra.mrb[0].mxu0 %v957
        %v1369 = vpop.f32.mrb[0].mxu0
        %v1370 = vadd.f32 0.0, %v1369
        %v1371 = vpop.f32.mrb[0].mxu0
        %v1372 = vadd.f32 0.0, %v1371
        %v1373 = vpop.f32.mrb[0].mxu0
        %v1374 = vadd.f32 0.0, %v1373
        %v1375 = vpop.f32.mrb[0].mxu0
        %v1376 = vadd.f32 0.0, %v1375
        %1377 = vmatprep.mubr.bf16.mxu0 %v962
        %1378 = vmatmul.mubr.bf16.gmra.mrb[0].mxu0 %v961
        %v1379 = vpop.f32.mrb[0].mxu0
        %v1380 = vadd.f32 0.0, %v1379
        %v1381 = vpop.f32.mrb[0].mxu0
        %v1382 = vadd.f32 0.0, %v1381
        %v1383 = vpop.f32.mrb[0].mxu0
        %v1384 = vpop.f32.mrb[0].mxu0
        %1385 = vdwg.mxu0
        %1386 = vmatprep.subr.bf16.mxu0 %v1218
        %1387 = vmatpush1.bf16.msra.mxu0 %v1217
        %1388 = vmatprep.subr.bf16.mxu0 %v1220
        %1389 = vmatpush1.bf16.msra.mxu0 %v1219
        %1390 = vmatprep.subr.bf16.mxu0 %v1222
        %1391 = vmatpush1.bf16.msra.mxu0 %v1221
        %1392 = vmatprep.subr.bf16.mxu0 %v1224
        %1393 = vmatpush1.bf16.msra.mxu0 %v1223
        %1394 = vmatprep.subr.bf16.mxu0 %v1226
        %1395 = vmatpush1.bf16.msra.mxu0 %v1225
        %1396 = vmatprep.subr.bf16.mxu0 %v1228
        %1397 = vmatpush1.bf16.msra.mxu0 %v1227
        %1398 = vmatprep.subr.bf16.mxu0 %v1230
        %1399 = vmatpush1.bf16.msra.mxu0 %v1229
        %1400 = vmatprep.subr.bf16.mxu0 %v1232
        %1401 = vmatpush1.bf16.msra.mxu0 %v1231
        %1402 = vmatprep.subr.bf16.mxu0 %v1234
        %1403 = vmatpush1.bf16.msra.mxu0 %v1233
        %1404 = vmatprep.subr.bf16.mxu0 %v1236
        %1405 = vmatpush1.bf16.msra.mxu0 %v1235
        %1406 = vmatprep.subr.bf16.mxu0 %v1238
        %1407 = vmatpush1.bf16.msra.mxu0 %v1237
        %1408 = vmatprep.subr.bf16.mxu0 %v1313
        %1409 = vmatpush1.bf16.msra.mxu0 %v1310
        %1410 = vmatprep.subr.bf16.mxu0 0
        %1411 = vmatpush1.bf16.msra.mxu0 0
        %1412 = vmatprep.subr.bf16.mxu0 0
        %1413 = vmatpush1.bf16.msra.mxu0 0
        %1414 = vmatprep.subr.bf16.mxu0 0
        %1415 = vmatpush1.bf16.msra.mxu0 0
        %1416 = vmatprep.subr.bf16.mxu0 0
        %1417 = vmatpush1.bf16.msra.mxu0 0
        %1418 = vmatprep.mubr.bf16.mxu0 %v1297
        %1419 = vmatmul.mubr.bf16.gmra.mrb[0].mxu0 %v951
        %v1420 = vpop.f32.mrb[0].mxu0
        %v1421 = vadd.f32 %v1350, %v1420
        %v1422 = vpop.f32.mrb[0].mxu0
        %v1423 = vadd.f32 %v1352, %v1422
        %v1424 = vpop.f32.mrb[0].mxu0
        %v1425 = vadd.f32 %v1354, %v1424
        %v1426 = vpop.f32.mrb[0].mxu0
        %v1427 = vadd.f32 %v1356, %v1426
        %1428 = vmatprep.mubr.bf16.mxu0 %v1300
        %1429 = vmatmul.mubr.bf16.gmra.mrb[0].mxu0 %v955
        %v1430 = vpop.f32.mrb[0].mxu0
        %v1431 = vadd.f32 %v1360, %v1430
        %v1432 = vpop.f32.mrb[0].mxu0
        %v1433 = vadd.f32 %v1362, %v1432
        %v1434 = vpop.f32.mrb[0].mxu0
        %v1435 = vadd.f32 %v1364, %v1434
        %v1436 = vpop.f32.mrb[0].mxu0
        %v1437 = vadd.f32 %v1366, %v1436
        %1438 = vmatprep.mubr.bf16.mxu0 %v1303
        %1439 = vmatmul.mubr.bf16.gmra.mrb[0].mxu0 %v959
        %v1440 = vpop.f32.mrb[0].mxu0
        %v1441 = vadd.f32 %v1370, %v1440
        %v1442 = vpop.f32.mrb[0].mxu0
        %v1443 = vadd.f32 %v1372, %v1442
        %v1444 = vpop.f32.mrb[0].mxu0
        %v1445 = vadd.f32 %v1374, %v1444
        %v1446 = vpop.f32.mrb[0].mxu0
        %v1447 = vadd.f32 %v1376, %v1446
        %1448 = vmatprep.mubr.bf16.mxu0 %v1306
        %1449 = vmatmul.mubr.bf16.gmra.mrb[0].mxu0 %v963
        %v1450 = vpop.f32.mrb[0].mxu0
        %v1451 = vadd.f32 %v1380, %v1450
        %v1452 = vpop.f32.mrb[0].mxu0
        %v1453 = vadd.f32 %v1382, %v1452
        %v1454 = vpop.f32.mrb[0].mxu0
        %v1455 = vpop.f32.mrb[0].mxu0
        %1456 = vdwg.mxu0
        %v1457 = vadd.f32 %v1421, %v1425
        %v1458 = vadd.f32 %v1457, %v1431
        %v1459 = vadd.f32 %v1458, %v1435
        %v1460 = vadd.f32 %v1459, %v1441
        %v1461 = vadd.f32 %v1460, %v1445
        %vm1462 = vcmask 1040384
        %v1463 = vsel %vm1462, %v1451, 0.0
        %v1464 = vadd.f32 %v1461, %v1463
        %v1465 = vrot.slane %v1464, 4
        %v1466 = vadd.f32 %v1464, %v1465
        %v1467 = vrot.slane %v1466, 2
        %v1468 = vadd.f32 %v1466, %v1467
        %v1469 = vrot.slane %v1468, 1
        %v1470 = vadd.f32 %v1468, %v1469
        %v1471 = vadd.f32 %v1423, %v1427
        %v1472 = vadd.f32 %v1471, %v1433
        %v1473 = vadd.f32 %v1472, %v1437
        %v1474 = vadd.f32 %v1473, %v1443
        %v1475 = vadd.f32 %v1474, %v1447
        %v1476 = vsel %vm1462, %v1453, 0.0
        %v1477 = vadd.f32 %v1475, %v1476
        %v1478 = vrot.slane %v1477, 4
        %v1479 = vadd.f32 %v1477, %v1478
        %v1480 = vrot.slane %v1479, 2
        %v1481 = vadd.f32 %v1479, %v1480
        %v1482 = vrot.slane %v1481, 1
        %v1483 = vadd.f32 %v1481, %v1482
        %v1484 = vmul.f32 %v1470, 0.020408163
        %v1485 = vmul.f32 %v1483, 0.020408163
        %v1486 = vmul.f32 %v1421, %v1421
        %v1487 = vmul.f32 %v1423, %v1423
        %v1488 = vmul.f32 %v1425, %v1425
        %v1489 = vmul.f32 %v1427, %v1427
        %v1490 = vmul.f32 %v1431, %v1431
        %v1491 = vmul.f32 %v1433, %v1433
        %v1492 = vmul.f32 %v1435, %v1435
        %v1493 = vmul.f32 %v1437, %v1437
        %v1494 = vmul.f32 %v1441, %v1441
        %v1495 = vmul.f32 %v1443, %v1443
        %v1496 = vmul.f32 %v1445, %v1445
        %v1497 = vmul.f32 %v1447, %v1447
        %v1498 = vmul.f32 %v1451, %v1451
        %v1499 = vmul.f32 %v1453, %v1453
        %v1500 = vadd.f32 %v1486, %v1488
        %v1501 = vadd.f32 %v1500, %v1490
        %v1502 = vadd.f32 %v1501, %v1492
        %v1503 = vadd.f32 %v1502, %v1494
        %v1504 = vadd.f32 %v1503, %v1496
        %v1505 = vsel %vm1462, %v1498, 0.0
        %v1506 = vadd.f32 %v1504, %v1505
        %v1507 = vrot.slane %v1506, 4
        %v1508 = vadd.f32 %v1506, %v1507
        %v1509 = vrot.slane %v1508, 2
        %v1510 = vadd.f32 %v1508, %v1509
        %v1511 = vrot.slane %v1510, 1
        %v1512 = vadd.f32 %v1510, %v1511
        %v1513 = vadd.f32 %v1487, %v1489
        %v1514 = vadd.f32 %v1513, %v1491
        %v1515 = vadd.f32 %v1514, %v1493
        %v1516 = vadd.f32 %v1515, %v1495
        %v1517 = vadd.f32 %v1516, %v1497
        %v1518 = vsel %vm1462, %v1499, 0.0
        %v1519 = vadd.f32 %v1517, %v1518
        %v1520 = vrot.slane %v1519, 4
        %v1521 = vadd.f32 %v1519, %v1520
        %v1522 = vrot.slane %v1521, 2
        %v1523 = vadd.f32 %v1521, %v1522
        %v1524 = vrot.slane %v1523, 1
        %v1525 = vadd.f32 %v1523, %v1524
        %v1526 = vmul.f32 %v1512, 0.020408163
        %v1527 = vmul.f32 %v1525, 0.020408163
        %v1528 = vmul.f32 %v1484, %v1484
        %v1529 = vmul.f32 %v1485, %v1485
        %v1530 = vsub.f32 %v1526, %v1528
        %v1531 = vsub.f32 %v1527, %v1529
        %v1532 = vmax.f32 %v1530, 0.0
        %v1533 = vmax.f32 %v1531, 0.0
        %v1534 = vadd.f32 %v1532, 1e-05
        %v1535 = vadd.f32 %v1533, 1e-05
        %v1536 = vrsqrt.pop %v1534
        %v1537 = vrsqrt.pop %v1535
        %v1538 = vld [vmem:[%s556] sm:$0x3]
        %v1540 = vlaneseq
        %v1541 = vshrl.u32 %v1540, 7
        %v1542 = vsub.s32 0, %v1541
        %v1543 = vrot.slane %v1538, %v1542
        %v1544 = vlaneseq
        %v1545 = vshrl.u32 %v1544, 7
        %v1546 = vsub.s32 1, %v1545
        %v1547 = vrot.slane %v1538, %v1546
        %v1550 = vmul.f32 %v1536, %v1543
        %v1551 = vmul.f32 %v1537, %v1547
        %v1552 = vld [vmem:[%s561] sm:$0x3]
        %v1553 = vmul.f32 %v1484, %v1550
        %v1554 = vmul.f32 %v1485, %v1551
        %v1557 = vcombine.low %v1553, %v1554
        %v1559 = vunpack.c.l.s4 1966171168
        %v1560 = vunpack.c.0.s8 %v1559
        %v1561 = vlaneseq
        %v1562 = vshrl.u32 %v1561, 7
        %v1563 = vsub.s32 %v1560, %v1562
        %v1564 = vrot.slane %v1557, %v1563
        %v1566 = vunpack.c.l.s4 1966171168
        %v1567 = vunpack.c.0.s8 %v1566
        %v1568 = vlaneseq
        %v1569 = vshrl.u32 %v1568, 7
        %v1570 = vsub.s32 %v1567, %v1569
        %v1571 = vrot.slane %v1564, %v1570
        %v1573 = vsub.f32 %v1552, %v1571
        %v1574 = vlaneseq
        %v1575 = vshrl.u32 %v1574, 7
        %v1576 = vsub.s32 0, %v1575
        %v1577 = vrot.slane %v1550, %v1576
        %v1578 = vlaneseq
        %v1579 = vshrl.u32 %v1578, 7
        %v1580 = vsub.s32 0, %v1579
        %v1581 = vrot.slane %v1551, %v1580
        %v1582 = vmul.f32 %v1421, %v1577
        %v1583 = vmul.f32 %v1423, %v1581
        %v1584 = vmul.f32 %v1425, %v1577
        %v1585 = vmul.f32 %v1427, %v1581
        %v1586 = vmul.f32 %v1431, %v1577
        %v1587 = vmul.f32 %v1433, %v1581
        %v1588 = vmul.f32 %v1435, %v1577
        %v1589 = vmul.f32 %v1437, %v1581
        %v1590 = vmul.f32 %v1441, %v1577
        %v1591 = vmul.f32 %v1443, %v1581
        %v1592 = vmul.f32 %v1445, %v1577
        %v1593 = vmul.f32 %v1447, %v1581
        %v1594 = vmul.f32 %v1451, %v1577
        %v1595 = vmul.f32 %v1453, %v1581
        %v1597 = vlaneseq
        %v1598 = vshrl.u32 %v1597, 7
        %v1599 = vsub.s32 0, %v1598
        %v1600 = vrot.slane %v1573, %v1599
        %v1601 = vlaneseq
        %v1602 = vshrl.u32 %v1601, 7
        %v1603 = vsub.s32 1, %v1602
        %v1604 = vrot.slane %v1573, %v1603
        %v1607 = vadd.f32 %v1582, %v1600
        %v1608 = vadd.f32 %v1583, %v1604
        %v1609 = vadd.f32 %v1584, %v1600
        %v1610 = vadd.f32 %v1585, %v1604
        %v1611 = vadd.f32 %v1586, %v1600
        %v1612 = vadd.f32 %v1587, %v1604
        %v1613 = vadd.f32 %v1588, %v1600
        %v1614 = vadd.f32 %v1589, %v1604
        %v1615 = vadd.f32 %v1590, %v1600
        %v1616 = vadd.f32 %v1591, %v1604
        %v1617 = vadd.f32 %v1592, %v1600
        %v1618 = vadd.f32 %v1593, %v1604
        %v1619 = vadd.f32 %v1594, %v1600
        %v1620 = vadd.f32 %v1595, %v1604
        %1621 = vst [vmem:[%s551] sm:$0xff] %v1607
        %1622 = vst [vmem:[%s551 + $0x8] sm:$0xff] %v1608
        %1623 = vst [vmem:[%s551 + $0x10] sm:$0xff] %v1609
        %1624 = vst [vmem:[%s551 + $0x18] sm:$0xff] %v1610
        %1625 = vst [vmem:[%s551 + $0x20] sm:$0xff] %v1611
        %1626 = vst [vmem:[%s551 + $0x28] sm:$0xff] %v1612
        %1627 = vst [vmem:[%s551 + $0x30] sm:$0xff] %v1613
        %1628 = vst [vmem:[%s551 + $0x38] sm:$0xff] %v1614
        %1629 = vst [vmem:[%s551 + $0x40] sm:$0xff] %v1615
        %1630 = vst [vmem:[%s551 + $0x48] sm:$0xff] %v1616
        %1631 = vst [vmem:[%s551 + $0x50] sm:$0xff] %v1617
        %1632 = vst [vmem:[%s551 + $0x58] sm:$0xff] %v1618
        %1633 = vst [vmem:[%s551 + $0x60] sm:$0x1] %v1619
        %1634 = vst [vmem:[%s551 + $0x68] sm:$0x1] %v1620
        %s1635 = sand.u32 %s188, 1
        %s1636 = sand.u32 %s188, 1
        %s1637 = smul.addr %s1636, 112
        %s1638 = scalar_lea.vmem [#allocation3], %s1637
        // Predicated region
        $region87: #{module_m_forward.1} parent=81 // pred_check
          %p1639 = pneg %p198
        $region88: #{module_m_forward.1} parent=81 // pred_check_branch
          %1641 = sbr.rel (%p1639) target = $region90
        $region89: #{module_m_forward.1} parent=81 // pred_region
          %s1642 = smul.u32 2, %s18
          %s1643 = smul.addr %s1642, 8
          %s1644 = scalar_lea.vmem %s7, %s1643
          // Predicated region
          $region91: #{module_m_forward.1} parent=89 // pred_check
            _
          $region92: #{module_m_forward.1} parent=89 // pred_check_branch
            %1646 = sbr.rel (0) target = $region94
          $region93: #{module_m_forward.1} parent=89 // pred_region
            // Predicated region
            $region95: #{module_m_forward.1} parent=93 // pred_check
              _
            $region96: #{module_m_forward.1} parent=93 // pred_check_branch
              %1648 = sbr.rel (0) target = $region98
            $region97: #{module_m_forward.1} parent=93 // pred_region
              loop: start=0, step=1, limit=1
              $region99: #{module_m_forward.1} parent=97 // loop_pre_header
                _
              $region100: #{module_m_forward.1} parent=97 // loop_header
                %s1650 = sphi 0, %s1654
                %p1651 = scmp.ge.s32.totalorder %s1650, 1
                %s1655 = sphi %s1638, %s1638
                %s1656 = sphi %s1644, %s1644
              $region101: #{module_m_forward.1} parent=97 // loop_header_branch
                %1653 = sbr.rel (%p1651) target = $region105
              $region102: #{module_m_forward.1} parent=97 // loop_body
                %v1657 = vld [vmem:[%s1655] sm:$0xff]
                %1658 = vst [vmem:[%s1656] sm:$0xff] %v1657
                %v1659 = vld [vmem:[%s1655 + $0x8] sm:$0xff]
                %1660 = vst [vmem:[%s1656 + $0x8] sm:$0xff] %v1659
                %v1661 = vld [vmem:[%s1655 + $0x10] sm:$0xff]
                %1662 = vst [vmem:[%s1656 + $0x20] sm:$0xff] %v1661
                %v1663 = vld [vmem:[%s1655 + $0x18] sm:$0xff]
                %1664 = vst [vmem:[%s1656 + $0x28] sm:$0xff] %v1663
                %v1665 = vld [vmem:[%s1655 + $0x20] sm:$0xff]
                %1666 = vst [vmem:[%s1656 + $0x40] sm:$0xff] %v1665
                %v1667 = vld [vmem:[%s1655 + $0x28] sm:$0xff]
                %1668 = vst [vmem:[%s1656 + $0x48] sm:$0xff] %v1667
                %v1669 = vld [vmem:[%s1655 + $0x30] sm:$0xff]
                %1670 = vst [vmem:[%s1656 + $0x60] sm:$0xff] %v1669
                %v1671 = vld [vmem:[%s1655 + $0x38] sm:$0xff]
                %1672 = vst [vmem:[%s1656 + $0x68] sm:$0xff] %v1671
                %v1673 = vld [vmem:[%s1655 + $0x40] sm:$0xff]
                %1674 = vst [vmem:[%s1656 + $0x80] sm:$0xff] %v1673
                %v1675 = vld [vmem:[%s1655 + $0x48] sm:$0xff]
                %1676 = vst [vmem:[%s1656 + $0x88] sm:$0xff] %v1675
                %v1677 = vld [vmem:[%s1655 + $0x50] sm:$0xff]
                %1678 = vst [vmem:[%s1656 + $0xa0] sm:$0xff] %v1677
                %v1679 = vld [vmem:[%s1655 + $0x58] sm:$0xff]
                %1680 = vst [vmem:[%s1656 + $0xa8] sm:$0xff] %v1679
                %v1681 = vld [vmem:[%s1655 + $0x60] sm:$0xff]
                %1682 = vst [vmem:[%s1656 + $0xc0] sm:$0xff] %v1681
                %v1683 = vld [vmem:[%s1655 + $0x68] sm:$0xff]
                %1684 = vst [vmem:[%s1656 + $0xc8] sm:$0xff] %v1683
              $region103: #{module_m_forward.1} parent=97 // loop_footer
                %s1654 = sadd.s32 1, %s1650
              $region104: #{module_m_forward.1} parent=97 // loop_footer_branch
                %1649 = sbr.rel target = $region100
              $region105: #{module_m_forward.1} parent=97 // loop_exit
                _
            $region98: #{module_m_forward.1} parent=93 // pred_fallthru
              _
            // Predicated region
            $region106: #{module_m_forward.1} parent=93 // pred_check
              _
            $region107: #{module_m_forward.1} parent=93 // pred_check_branch
              %1686 = sbr.rel target = $region109
            $region108: #{module_m_forward.1} parent=93 // pred_region
              _
            $region109: #{module_m_forward.1} parent=93 // pred_fallthru
              _
          $region94: #{module_m_forward.1} parent=89 // pred_fallthru
            _
          %1687 = vnop
        $region90: #{module_m_forward.1} parent=81 // pred_fallthru
          _
      $region82: #{module_m_forward.1} parent=5 // pred_fallthru
        _
      %p1688 = scmp.le.s32.totalorder 2, %s13
      // Predicated region
      $region110: #{module_m_forward.1} parent=5 // pred_check
        %p1689 = pneg %p1688
      $region111: #{module_m_forward.1} parent=5 // pred_check_branch
        %1691 = sbr.rel (%p1689) target = $region113
      $region112: #{module_m_forward.1} parent=5 // pred_region
        %s1692 = ssub.s32 %s13, 2
        // Predicated region
        $region114: #{module_m_forward.1} parent=112 // pred_check
          %p1693 = pneg %p204
        $region115: #{module_m_forward.1} parent=112 // pred_check_branch
          %1695 = sbr.rel (%p1693) target = $region117
        $region116: #{module_m_forward.1} parent=112 // pred_region
          %s1696 = sand.u32 %s189, 1
          %s1697 = sand.u32 %s189, 1
          %s1698 = smul.addr %s1697, 112
          %s1699 = scalar_lea.vmem [#allocation3], %s1698
        $region117: #{module_m_forward.1} parent=112 // pred_fallthru
          _
      $region113: #{module_m_forward.1} parent=5 // pred_fallthru
        _
    $region6: #{module_m_forward.1} parent=1 // loop_footer
      %s17 = sadd.s32 1, %s13
    $region7: #{module_m_forward.1} parent=1 // loop_footer_branch
      %12 = sbr.rel target = $region3
    $region8: #{module_m_forward.1} parent=1 // loop_exit
      _

</llo_original>
